<compile_context>
chip_gen: v7x
topology: tpu7x:2x2x1
jax: 0.10.0
libtpu: 0.0.40
codegen_flags: <defaults>
</compile_context>

<pallas_src>
import jax
import jax.numpy as jnp
from jax.experimental import pallas as pl
from jax.experimental.pallas import tpu as pltpu

INPUT_SIZE = 784
HIDDEN_SIZE = 512
NUM_CLASSES = 10
LANE = 128  # TPU lane width; fc2 output is padded to this for lane-dense stores


def mlp_kernel(x_ref, w1_ref, b1_ref, w2_ref, b2_ref, o_ref):
    # Cast x to bf16 on the VPU (cheap, hidden under the DMA pipeline) so the
    # MXU runs in bf16 while HBM only ever sees the original f32 x once.
    x = x_ref[...].astype(jnp.bfloat16)
    # fc1: bf16 MXU inputs, f32 accumulation; bias add + ReLU on the VPU.
    h = jnp.dot(x, w1_ref[...], preferred_element_type=jnp.float32)
    h = jnp.maximum(h + b1_ref[...], 0.0)          # b1 is (1, hidden), broadcasts
    # fc2 over the 128-lane-padded output columns (unmasked, lane-dense store).
    out = jnp.dot(h.astype(jnp.bfloat16), w2_ref[...],
                  preferred_element_type=jnp.float32)
    o_ref[...] = (out + b2_ref[...]).astype(o_ref.dtype)   # bf16 writeback


def prepare_params(w1, b1, w2, b2):
    """One-time parameter layout prep (hoisted out of the per-call path).

    w1: [784, 512], b1: [1, 512]   (weights stored as [in, out] = torch weight.T)
    w2: [512, 10],  b2: [1, 10]
    Returns bf16 weights and f32 biases, with fc2 zero-padded to a 128-lane width.
    """
    hid = w1.shape[1]
    ncls = w2.shape[1]
    w1b = w1.astype(jnp.bfloat16)
    b1f = b1.reshape(1, hid).astype(jnp.float32)
    w2b = jnp.zeros((hid, LANE), jnp.bfloat16).at[:, :ncls].set(
        w2.astype(jnp.bfloat16))
    b2f = jnp.zeros((1, LANE), jnp.float32).at[:, :ncls].set(
        b2.reshape(1, ncls).astype(jnp.float32))
    return w1b, b1f, w2b, b2f


def _round_up(x, m):
    return ((x + m - 1) // m) * m


def _choose_batch_tile(B):
    if B <= 256:
        # One (possibly partial) block covering the whole batch; sublane-aligned.
        return _round_up(B, 8)
    # Large batches: big tiles amortize the ~0.35 us per-grid-step overhead, but
    # keep grid >= 2 so the "parallel" axis can shard across both v7x TCs, and
    # cap at 1024 so the double-buffered f32 x tile fits v5e's 16 MiB scoped
    # VMEM default without flag tweaks.
    half = _round_up(pl.cdiv(B, 2), 128)
    return min(1024, half)


def mlp_forward(x, w1b, b1f, w2b, b2f, *, num_classes=NUM_CLASSES,
                batch_tile=None):
    """Fused Linear(784->512) -> ReLU -> Linear(512->10).

    x:   [B, 784] f32
    w1b: [784, 512] bf16, b1f: [1, 512] f32
    w2b: [512, 128] bf16 (lane-padded), b2f: [1, 128] f32 (lane-padded)
    returns [B, num_classes] f32
    """
    B, in_sz = x.shape
    hid = w1b.shape[1]

    if batch_tile is None:
        batch_tile = _choose_batch_tile(B)
    grid = (pl.cdiv(B, batch_tile),)   # partial last block handled by Pallas

    flops = 2 * B * (in_sz * hid + hid * LANE)
    bytes_accessed = (B * in_sz * 4            # x read (f32)
                      + B * LANE * 2           # bf16 logits writeback
                      + in_sz * hid * 2        # w1 (bf16)
                      + hid * LANE * 2         # w2 (bf16, lane-padded)
                      + hid * 4 + LANE * 4)    # biases (f32)
    cost = pl.CostEstimate(flops=flops, transcendentals=0,
                           bytes_accessed=bytes_accessed)

    # Weights / biases use a constant (0, 0) index_map -> resident across all
    # grid steps; a single buffer suffices.
    resident = pl.Buffered(1)

    out_padded = pl.pallas_call(
        mlp_kernel,
        out_shape=jax.ShapeDtypeStruct((B, LANE), jnp.bfloat16),
        grid_spec=pltpu.PrefetchScalarGridSpec(
            num_scalar_prefetch=0,
            grid=grid,
            in_specs=[
                # x: tile over batch, full feature dim, f32 (cast in-kernel)
                pl.BlockSpec((batch_tile, in_sz), lambda i: (i, 0)),
                # resident weights / biases
                pl.BlockSpec((in_sz, hid), lambda i: (0, 0),
                             pipeline_mode=resident),
                pl.BlockSpec((1, hid), lambda i: (0, 0),
                             pipeline_mode=resident),
                pl.BlockSpec((hid, LANE), lambda i: (0, 0),
                             pipeline_mode=resident),
                pl.BlockSpec((1, LANE), lambda i: (0, 0),
                             pipeline_mode=resident),
            ],
            out_specs=pl.BlockSpec((batch_tile, LANE), lambda i: (i, 0)),
        ),
        compiler_params=pltpu.CompilerParams(
            dimension_semantics=("parallel",),
        ),
        cost_estimate=cost,
    )(x, w1b, b1f, w2b, b2f)

    # Strip the lane padding and return f32 logits (tiny slice, done outside).
    return out_padded[:, :num_classes].astype(jnp.float32)


def reference_forward_bf16(x, w1, b1, w2, b2):
    # Matches kernel numerics: bf16 MXU inputs, f32 accumulation, bf16 writeback.
    h = jnp.dot(x.astype(jnp.bfloat16), w1.astype(jnp.bfloat16),
                preferred_element_type=jnp.float32)
    h = jnp.maximum(h + b1, 0.0)
    out = jnp.dot(h.astype(jnp.bfloat16), w2.astype(jnp.bfloat16),
                  preferred_element_type=jnp.float32)
    return (out + b2).astype(jnp.bfloat16).astype(jnp.float32)


def reference_forward_f32(x, w1, b1, w2, b2):
    h = jnp.maximum(x @ w1 + b1, 0.0)
    return h @ w2 + b2


if __name__ == "__main__":
    key = jax.random.PRNGKey(0)
    kx, kw1, kb1, kw2, kb2 = jax.random.split(key, 5)

    # Deterministic parameter init (~Kaiming-uniform scale like torch Linear).
    lim1 = 1.0 / (INPUT_SIZE ** 0.5)
    w1 = jax.random.uniform(kw1, (INPUT_SIZE, HIDDEN_SIZE), jnp.float32, -lim1, lim1)
    b1 = jax.random.uniform(kb1, (1, HIDDEN_SIZE), jnp.float32, -lim1, lim1)
    lim2 = 1.0 / (HIDDEN_SIZE ** 0.5)
    w2 = jax.random.uniform(kw2, (HIDDEN_SIZE, NUM_CLASSES), jnp.float32, -lim2, lim2)
    b2 = jax.random.uniform(kb2, (1, NUM_CLASSES), jnp.float32, -lim2, lim2)

    # One-time layout prep (bf16 cast + fc2 lane-padding), hoisted out of the
    # per-call path.
    w1b, b1f, w2b, b2f = prepare_params(w1, b1, w2, b2)

    fwd = jax.jit(mlp_forward)

    # Case 1: small batch, exact block.
    B = 16
    x = jax.random.normal(kx, (B, INPUT_SIZE), dtype=jnp.float32)
    out = jax.block_until_ready(fwd(x, w1b, b1f, w2b, b2f))
    assert out.shape == (B, NUM_CLASSES), out.shape
    ref_bf16 = reference_forward_bf16(x, w1, b1, w2, b2)
    ref_f32 = reference_forward_f32(x, w1, b1, w2, b2)
    assert jnp.allclose(out, ref_bf16, atol=2e-2, rtol=2e-2), "mismatch vs bf16 reference"
    assert jnp.allclose(out, ref_f32, atol=5e-2, rtol=5e-2), "mismatch vs f32 reference"

    # Case 2: ragged batch -> partial last block (masked stores, no wrapper pad).
    B2 = 10
    x2 = jax.random.normal(kx, (B2, INPUT_SIZE), dtype=jnp.float32)
    out2 = jax.block_until_ready(fwd(x2, w1b, b1f, w2b, b2f))
    assert out2.shape == (B2, NUM_CLASSES), out2.shape
    ref2 = reference_forward_bf16(x2, w1, b1, w2, b2)
    assert jnp.allclose(out2, ref2, atol=2e-2, rtol=2e-2), "mismatch on ragged batch"

    print("KERNEL_OK")
</pallas_src>

<mosaic_0001>
module attributes {stable_mosaic.version = 11 : i64} {
  func.func @mlp_kernel(%arg0: i32, %arg1: memref<16x784xf32, #tpu.memory_space<vmem>>, %arg2: memref<784x512xbf16, #tpu.memory_space<vmem>>, %arg3: memref<1x512xf32, #tpu.memory_space<vmem>>, %arg4: memref<512x128xbf16, #tpu.memory_space<vmem>>, %arg5: memref<1x128xf32, #tpu.memory_space<vmem>>, %arg6: memref<16x128xbf16, #tpu.memory_space<vmem>>) attributes {dimension_semantics = [#tpu.dimension_semantics<parallel>], iteration_bounds = array<i64: 1>, scalar_prefetch = 0 : i64, scratch_operands = 0 : i64, tpu.core_type = #tpu.core_type<tc>, window_params = [{transform_indices = @transform_0, window_bounds = array<i64: 16, 784>}, {pipeline_mode = #tpu.pipeline_mode<synchronous>, transform_indices = @transform_1, window_bounds = array<i64: 784, 512>}, {pipeline_mode = #tpu.pipeline_mode<synchronous>, transform_indices = @transform_2, window_bounds = array<i64: 1, 512>}, {pipeline_mode = #tpu.pipeline_mode<synchronous>, transform_indices = @transform_3, window_bounds = array<i64: 512, 128>}, {pipeline_mode = #tpu.pipeline_mode<synchronous>, transform_indices = @transform_4, window_bounds = array<i64: 1, 128>}, {transform_indices = @transform_5, window_bounds = array<i64: 16, 128>}]} {
    %c0 = arith.constant 0 : index
    %c0_0 = arith.constant 0 : index
    %0 = vector.load %arg1[%c0, %c0_0] : memref<16x784xf32, #tpu.memory_space<vmem>>, vector<16x784xf32>
    %1 = arith.truncf %0 : vector<16x784xf32> to vector<16x784xbf16>
    %c0_1 = arith.constant 0 : index
    %c0_2 = arith.constant 0 : index
    %2 = vector.load %arg2[%c0_1, %c0_2] : memref<784x512xbf16, #tpu.memory_space<vmem>>, vector<784x512xbf16>
    %cst = arith.constant dense<0.000000e+00> : vector<16x512xf32>
    %3 = tpu.matmul %1, %2, %cst {dimension_numbers = #tpu.dot_dimension_numbers<[1], [0], [0], [1], [0, 0, 1, 1], [], []>} : vector<16x784xbf16>, vector<784x512xbf16>, vector<16x512xf32> -> vector<16x512xf32>
    %c0_3 = arith.constant 0 : index
    %c0_4 = arith.constant 0 : index
    %4 = vector.load %arg3[%c0_3, %c0_4] : memref<1x512xf32, #tpu.memory_space<vmem>>, vector<1x512xf32>
    %5 = vector.broadcast %4 : vector<1x512xf32> to vector<16x512xf32>
    %6 = arith.addf %3, %5 : vector<16x512xf32>
    %cst_5 = arith.constant 0.000000e+00 : f32
    %7 = vector.broadcast %cst_5 : f32 to vector<16x512xf32>
    %8 = arith.maximumf %6, %7 : vector<16x512xf32>
    %9 = arith.truncf %8 : vector<16x512xf32> to vector<16x512xbf16>
    %c0_6 = arith.constant 0 : index
    %c0_7 = arith.constant 0 : index
    %10 = vector.load %arg4[%c0_6, %c0_7] : memref<512x128xbf16, #tpu.memory_space<vmem>>, vector<512x128xbf16>
    %cst_8 = arith.constant dense<0.000000e+00> : vector<16x128xf32>
    %11 = tpu.matmul %9, %10, %cst_8 {dimension_numbers = #tpu.dot_dimension_numbers<[1], [0], [0], [1], [0, 0, 1, 1], [], []>} : vector<16x512xbf16>, vector<512x128xbf16>, vector<16x128xf32> -> vector<16x128xf32>
    %c0_9 = arith.constant 0 : index
    %c0_10 = arith.constant 0 : index
    %12 = vector.load %arg5[%c0_9, %c0_10] : memref<1x128xf32, #tpu.memory_space<vmem>>, vector<1x128xf32>
    %13 = vector.broadcast %12 : vector<1x128xf32> to vector<16x128xf32>
    %14 = arith.addf %11, %13 : vector<16x128xf32>
    %15 = arith.truncf %14 : vector<16x128xf32> to vector<16x128xbf16>
    %c0_11 = arith.constant 0 : index
    %c0_12 = arith.constant 0 : index
    %16 = vector.load %arg6[%c0_11, %c0_12] : memref<16x128xbf16, #tpu.memory_space<vmem>>, vector<16x128xbf16>
    tpu.vector_store %arg6[%c0_11, %c0_12], %15 {strides = array<i32>} : memref<16x128xbf16, #tpu.memory_space<vmem>>, vector<16x128xbf16>,
    return
  }
  func.func @transform_0(%arg0: i32) -> (i32, i32) {
    %c0_i32 = arith.constant 0 : i32
    %c0_i32_0 = arith.constant 0 : i32
    return %arg0, %c0_i32 : i32, i32
  }
  func.func @transform_1(%arg0: i32) -> (i32, i32) {
    %c0_i32 = arith.constant 0 : i32
    %c0_i32_0 = arith.constant 0 : i32
    %c0_i32_1 = arith.constant 0 : i32
    return %c0_i32, %c0_i32_0 : i32, i32
  }
  func.func @transform_2(%arg0: i32) -> (i32, i32) {
    %c0_i32 = arith.constant 0 : i32
    %c0_i32_0 = arith.constant 0 : i32
    %c0_i32_1 = arith.constant 0 : i32
    return %c0_i32, %c0_i32_0 : i32, i32
  }
  func.func @transform_3(%arg0: i32) -> (i32, i32) {
    %c0_i32 = arith.constant 0 : i32
    %c0_i32_0 = arith.constant 0 : i32
    %c0_i32_1 = arith.constant 0 : i32
    return %c0_i32, %c0_i32_0 : i32, i32
  }
  func.func @transform_4(%arg0: i32) -> (i32, i32) {
    %c0_i32 = arith.constant 0 : i32
    %c0_i32_0 = arith.constant 0 : i32
    %c0_i32_1 = arith.constant 0 : i32
    return %c0_i32, %c0_i32_0 : i32, i32
  }
  func.func @transform_5(%arg0: i32) -> (i32, i32) {
    %c0_i32 = arith.constant 0 : i32
    %c0_i32_0 = arith.constant 0 : i32
    return %arg0, %c0_i32 : i32, i32
  }
}

</mosaic_0001>

<llo_original>
// kernel: mlp_forward.1
$region0: #{mlp_forward.1}
  #allocation0 [shape = 'u32[]', space=smem, size = 0x4, offset = 0x4, fixed_abs, tag = 'smem constant byte address 0x4 - core index']
  #allocation1 [shape = 'u32[144,128]{1,0:T(1,128)}', space=vmem, size = 0x12000, scoped, tag = 'internal scratch']
  %s0 = inlined_call_operand.hbm [shape: f32[16,784], index: 0, kind: input, shape index: {}]
  %s1 = inlined_call_operand.hbm [shape: bf16[784,512], index: 1, kind: input, shape index: {}]
  %s2 = inlined_call_operand.vmem [shape: f32[1,512], index: 2, kind: input, shape index: {}]
  %s3 = inlined_call_operand.hbm [shape: bf16[512,128], index: 3, kind: input, shape index: {}]
  %s4 = inlined_call_operand.vmem [shape: f32[1,128], index: 4, kind: input, shape index: {}]
  %s5 = inlined_call_operand.vmem [shape: bf16[16,128], index: 5, kind: output, shape index: {}]
  %s6 = sld [smem:[#allocation0]]
  $region42: #{mlp_forward.1} parent=0
    _
  %s8 = ssub.s32 1, %s6
  %s9 = scalar_select 0, %s8, %s6
  $region1: #{mlp_forward.1} parent=0
    #allocation2 [shape = 'u8[57344]{0}', space=vmem, size = 0xe000, scoped, tag = 'input window, operand 0, single buffered']
    #allocation3 [shape = 's32[1]{0}', space=sflag, size = 0x4, scoped, tag = 'scoped memory for mlp_forward.1']
    #allocation4 [shape = 'u8[802816]{0}', space=vmem, size = 0xc4000, scoped, tag = 'input window, operand 1, single buffered']
    #allocation5 [shape = 's32[1]{0}', space=sflag, size = 0x4, scoped, tag = 'scoped memory for mlp_forward.1']
    #allocation6 [shape = 'u8[131072]{0}', space=vmem, size = 0x20000, scoped, tag = 'input window, operand 3, single buffered']
    %10 = vsyncpa [#allocation3], 0
    %11 = vsyncpa [#allocation5], 0
    // Predicated region
    $region2: #{mlp_forward.1} parent=1 // pred_check
      _
    $region3: #{mlp_forward.1} parent=1 // pred_check_branch
      %13 = sbr.rel (0) target = $region5
    $region4: #{mlp_forward.1} parent=1 // pred_region
      %s15 = ssub.s32 1792, 1792
      %16 = vsyncadd [#allocation3], %s15
      %s17 = sshll.u32 [#allocation2], 4
      %s18 = int_to_ptr.vmem [resolvable:$true] %s17
      %23 = dma.hbm_to_vmem [thread:$0]  %s0, 1792, %s18, [#allocation3], 896, 896, 56
    $region5: #{mlp_forward.1} parent=1 // pred_fallthru
      _
    // Predicated region
    $region6: #{mlp_forward.1} parent=1 // pred_check
      _
    $region7: #{mlp_forward.1} parent=1 // pred_check_branch
      %25 = sbr.rel (0) target = $region9
    $region8: #{mlp_forward.1} parent=1 // pred_region
      %s27 = ssub.s32 25088, 25088
      %28 = vsyncadd [#allocation5], %s27
      %s29 = sshll.u32 [#allocation4], 4
      %s30 = int_to_ptr.vmem [resolvable:$true] %s29
      %35 = dma.hbm_to_vmem [thread:$0]  %s1, 25088, %s30, [#allocation5], 256, 256, 16
    $region9: #{mlp_forward.1} parent=1 // pred_fallthru
      _
    // Predicated region
    $region10: #{mlp_forward.1} parent=1 // pred_check
      _
    $region11: #{mlp_forward.1} parent=1 // pred_check_branch
      %37 = sbr.rel (0) target = $region13
    $region12: #{mlp_forward.1} parent=1 // pred_region
      _
    $region13: #{mlp_forward.1} parent=1 // pred_fallthru
      _
    // Predicated region
    $region14: #{mlp_forward.1} parent=1 // pred_check
      _
    $region15: #{mlp_forward.1} parent=1 // pred_check_branch
      %39 = sbr.rel (0) target = $region17
    $region16: #{mlp_forward.1} parent=1 // pred_region
      %s41 = ssub.s32 4096, 4096
      %42 = vsyncadd [#allocation5], %s41
      %s43 = sshll.u32 [#allocation6], 4
      %s44 = int_to_ptr.vmem [resolvable:$true] %s43
      %49 = dma.hbm_to_vmem [thread:$0]  %s3, 4096, %s44, [#allocation5], 64, 64, 4
    $region17: #{mlp_forward.1} parent=1 // pred_fallthru
      _
    // Predicated region
    $region18: #{mlp_forward.1} parent=1 // pred_check
      _
    $region19: #{mlp_forward.1} parent=1 // pred_check_branch
      %51 = sbr.rel (0) target = $region21
    $region20: #{mlp_forward.1} parent=1 // pred_region
      _
    $region21: #{mlp_forward.1} parent=1 // pred_fallthru
      _
    // Predicated region
    $region22: #{mlp_forward.1} parent=1 // pred_check
      _
    $region23: #{mlp_forward.1} parent=1 // pred_check_branch
      %53 = sbr.rel (0) target = $region25
    $region24: #{mlp_forward.1} parent=1 // pred_region
      %54 = dma.done [#allocation3], 1792
    $region25: #{mlp_forward.1} parent=1 // pred_fallthru
      _
    // Predicated region
    $region26: #{mlp_forward.1} parent=1 // pred_check
      _
    $region27: #{mlp_forward.1} parent=1 // pred_check_branch
      %56 = sbr.rel (0) target = $region29
    $region28: #{mlp_forward.1} parent=1 // pred_region
      %57 = dma.done [#allocation5], 25088
    $region29: #{mlp_forward.1} parent=1 // pred_fallthru
      _
    // Predicated region
    $region30: #{mlp_forward.1} parent=1 // pred_check
      _
    $region31: #{mlp_forward.1} parent=1 // pred_check_branch
      %59 = sbr.rel (0) target = $region33
    $region32: #{mlp_forward.1} parent=1 // pred_region
      %60 = dma.done [#allocation5], 4096
    $region33: #{mlp_forward.1} parent=1 // pred_fallthru
      _
    %v62 = vld [vmem:[#allocation2] sm:$0xff]
    %v63 = vld [vmem:[#allocation2 + $0x8] sm:$0xff]
    %v64 = vld [vmem:[#allocation2 + $0x10] sm:$0xff]
    %v65 = vld [vmem:[#allocation2 + $0x18] sm:$0xff]
    %v66 = vld [vmem:[#allocation2 + $0x20] sm:$0xff]
    %v67 = vld [vmem:[#allocation2 + $0x28] sm:$0xff]
    %v68 = vld [vmem:[#allocation2 + $0x30] sm:$0xff]
    %v69 = vld [vmem:[#allocation2 + $0x38] sm:$0xff]
    %v70 = vld [vmem:[#allocation2 + $0x40] sm:$0xff]
    %v71 = vld [vmem:[#allocation2 + $0x48] sm:$0xff]
    %v72 = vld [vmem:[#allocation2 + $0x50] sm:$0xff]
    %v73 = vld [vmem:[#allocation2 + $0x58] sm:$0xff]
    %v74 = vld [vmem:[#allocation2 + $0x60] sm:$0xff]
    %v75 = vld [vmem:[#allocation2 + $0x68] sm:$0xff]
    %v76 = vpack.c.bf16 %v69, %v62
    %v77 = vpack.c.bf16 %v70, %v63
    %v78 = vpack.c.bf16 %v71, %v64
    %v79 = vpack.c.bf16 %v72, %v65
    %v80 = vpack.c.bf16 %v73, %v66
    %v81 = vpack.c.bf16 %v74, %v67
    %v82 = vpack.c.bf16 %v75, %v68
    %v83 = vld [vmem:[#allocation4] sm:$0xff]
    %v84 = vld [vmem:[#allocation4 + $0x8] sm:$0xff]
    %v85 = vld [vmem:[#allocation4 + $0x10] sm:$0xff]
    %v86 = vld [vmem:[#allocation4 + $0x18] sm:$0xff]
    %v87 = vld [vmem:[#allocation4 + $0x20] sm:$0xff]
    %v88 = vld [vmem:[#allocation4 + $0x28] sm:$0xff]
    %v89 = vld [vmem:[#allocation4 + $0x30] sm:$0xff]
    %v90 = vld [vmem:[#allocation4 + $0x38] sm:$0xff]
    %v91 = vld [vmem:[#allocation4 + $0x40] sm:$0xff]
    %v92 = vld [vmem:[#allocation4 + $0x48] sm:$0xff]
    %v93 = vld [vmem:[#allocation4 + $0x50] sm:$0xff]
    %v94 = vld [vmem:[#allocation4 + $0x58] sm:$0xff]
    %v95 = vld [vmem:[#allocation4 + $0x60] sm:$0xff]
    %v96 = vld [vmem:[#allocation4 + $0x68] sm:$0xff]
    %v97 = vld [vmem:[#allocation4 + $0x70] sm:$0xff]
    %v98 = vld [vmem:[#allocation4 + $0x78] sm:$0xff]
    %v99 = vld [vmem:[#allocation4 + $0x80] sm:$0xff]
    %v100 = vld [vmem:[#allocation4 + $0x88] sm:$0xff]
    %v101 = vld [vmem:[#allocation4 + $0x90] sm:$0xff]
    %v102 = vld [vmem:[#allocation4 + $0x98] sm:$0xff]
    %v103 = vld [vmem:[#allocation4 + $0xa0] sm:$0xff]
    %v104 = vld [vmem:[#allocation4 + $0xa8] sm:$0xff]
    %v105 = vld [vmem:[#allocation4 + $0xb0] sm:$0xff]
    %v106 = vld [vmem:[#allocation4 + $0xb8] sm:$0xff]
    %v107 = vld [vmem:[#allocation4 + $0xc0] sm:$0xff]
    %v108 = vld [vmem:[#allocation4 + $0xc8] sm:$0xff]
    %v109 = vld [vmem:[#allocation4 + $0xd0] sm:$0xff]
    %v110 = vld [vmem:[#allocation4 + $0xd8] sm:$0xff]
    %v111 = vld [vmem:[#allocation4 + $0xe0] sm:$0xff]
    %v112 = vld [vmem:[#allocation4 + $0xe8] sm:$0xff]
    %v113 = vld [vmem:[#allocation4 + $0xf0] sm:$0xff]
    %v114 = vld [vmem:[#allocation4 + $0xf8] sm:$0xff]
    %v115 = vld [vmem:[#allocation4 + $0x100] sm:$0xff]
    %v116 = vld [vmem:[#allocation4 + $0x108] sm:$0xff]
    %v117 = vld [vmem:[#allocation4 + $0x110] sm:$0xff]
    %v118 = vld [vmem:[#allocation4 + $0x118] sm:$0xff]
    %v119 = vld [vmem:[#allocation4 + $0x120] sm:$0xff]
    %v120 = vld [vmem:[#allocation4 + $0x128] sm:$0xff]
    %v121 = vld [vmem:[#allocation4 + $0x130] sm:$0xff]
    %v122 = vld [vmem:[#allocation4 + $0x138] sm:$0xff]
    %v123 = vld [vmem:[#allocation4 + $0x140] sm:$0xff]
    %v124 = vld [vmem:[#allocation4 + $0x148] sm:$0xff]
    %v125 = vld [vmem:[#allocation4 + $0x150] sm:$0xff]
    %v126 = vld [vmem:[#allocation4 + $0x158] sm:$0xff]
    %v127 = vld [vmem:[#allocation4 + $0x160] sm:$0xff]
    %v128 = vld [vmem:[#allocation4 + $0x168] sm:$0xff]
    %v129 = vld [vmem:[#allocation4 + $0x170] sm:$0xff]
    %v130 = vld [vmem:[#allocation4 + $0x178] sm:$0xff]
    %v131 = vld [vmem:[#allocation4 + $0x180] sm:$0xff]
    %v132 = vld [vmem:[#allocation4 + $0x188] sm:$0xff]
    %v133 = vld [vmem:[#allocation4 + $0x190] sm:$0xff]
    %v134 = vld [vmem:[#allocation4 + $0x198] sm:$0xff]
    %v135 = vld [vmem:[#allocation4 + $0x1a0] sm:$0xff]
    %v136 = vld [vmem:[#allocation4 + $0x1a8] sm:$0xff]
    %v137 = vld [vmem:[#allocation4 + $0x1b0] sm:$0xff]
    %v138 = vld [vmem:[#allocation4 + $0x1b8] sm:$0xff]
    %v139 = vld [vmem:[#allocation4 + $0x1c0] sm:$0xff]
    %v140 = vld [vmem:[#allocation4 + $0x1c8] sm:$0xff]
    %v141 = vld [vmem:[#allocation4 + $0x1d0] sm:$0xff]
    %v142 = vld [vmem:[#allocation4 + $0x1d8] sm:$0xff]
    %v143 = vld [vmem:[#allocation4 + $0x1e0] sm:$0xff]
    %v144 = vld [vmem:[#allocation4 + $0x1e8] sm:$0xff]
    %v145 = vld [vmem:[#allocation4 + $0x1f0] sm:$0xff]
    %v146 = vld [vmem:[#allocation4 + $0x1f8] sm:$0xff]
    %v147 = vld [vmem:[#allocation4 + $0x200] sm:$0xff]
    %v148 = vld [vmem:[#allocation4 + $0x208] sm:$0xff]
    %v149 = vld [vmem:[#allocation4 + $0x210] sm:$0xff]
    %v150 = vld [vmem:[#allocation4 + $0x218] sm:$0xff]
    %v151 = vld [vmem:[#allocation4 + $0x220] sm:$0xff]
    %v152 = vld [vmem:[#allocation4 + $0x228] sm:$0xff]
    %v153 = vld [vmem:[#allocation4 + $0x230] sm:$0xff]
    %v154 = vld [vmem:[#allocation4 + $0x238] sm:$0xff]
    %v155 = vld [vmem:[#allocation4 + $0x240] sm:$0xff]
    %v156 = vld [vmem:[#allocation4 + $0x248] sm:$0xff]
    %v157 = vld [vmem:[#allocation4 + $0x250] sm:$0xff]
    %v158 = vld [vmem:[#allocation4 + $0x258] sm:$0xff]
    %v159 = vld [vmem:[#allocation4 + $0x260] sm:$0xff]
    %v160 = vld [vmem:[#allocation4 + $0x268] sm:$0xff]
    %v161 = vld [vmem:[#allocation4 + $0x270] sm:$0xff]
    %v162 = vld [vmem:[#allocation4 + $0x278] sm:$0xff]
    %v163 = vld [vmem:[#allocation4 + $0x280] sm:$0xff]
    %v164 = vld [vmem:[#allocation4 + $0x288] sm:$0xff]
    %v165 = vld [vmem:[#allocation4 + $0x290] sm:$0xff]
    %v166 = vld [vmem:[#allocation4 + $0x298] sm:$0xff]
    %v167 = vld [vmem:[#allocation4 + $0x2a0] sm:$0xff]
    %v168 = vld [vmem:[#allocation4 + $0x2a8] sm:$0xff]
    %v169 = vld [vmem:[#allocation4 + $0x2b0] sm:$0xff]
    %v170 = vld [vmem:[#allocation4 + $0x2b8] sm:$0xff]
    %v171 = vld [vmem:[#allocation4 + $0x2c0] sm:$0xff]
    %v172 = vld [vmem:[#allocation4 + $0x2c8] sm:$0xff]
    %v173 = vld [vmem:[#allocation4 + $0x2d0] sm:$0xff]
    %v174 = vld [vmem:[#allocation4 + $0x2d8] sm:$0xff]
    %v175 = vld [vmem:[#allocation4 + $0x2e0] sm:$0xff]
    %v176 = vld [vmem:[#allocation4 + $0x2e8] sm:$0xff]
    %v177 = vld [vmem:[#allocation4 + $0x2f0] sm:$0xff]
    %v178 = vld [vmem:[#allocation4 + $0x2f8] sm:$0xff]
    %v179 = vld [vmem:[#allocation4 + $0x300] sm:$0xff]
    %v180 = vld [vmem:[#allocation4 + $0x308] sm:$0xff]
    %v181 = vld [vmem:[#allocation4 + $0x310] sm:$0xff]
    %v182 = vld [vmem:[#allocation4 + $0x318] sm:$0xff]
    %v183 = vld [vmem:[#allocation4 + $0x320] sm:$0xff]
    %v184 = vld [vmem:[#allocation4 + $0x328] sm:$0xff]
    %v185 = vld [vmem:[#allocation4 + $0x330] sm:$0xff]
    %v186 = vld [vmem:[#allocation4 + $0x338] sm:$0xff]
    %v187 = vld [vmem:[#allocation4 + $0x340] sm:$0xff]
    %v188 = vld [vmem:[#allocation4 + $0x348] sm:$0xff]
    %v189 = vld [vmem:[#allocation4 + $0x350] sm:$0xff]
    %v190 = vld [vmem:[#allocation4 + $0x358] sm:$0xff]
    %v191 = vld [vmem:[#allocation4 + $0x360] sm:$0xff]
    %v192 = vld [vmem:[#allocation4 + $0x368] sm:$0xff]
    %v193 = vld [vmem:[#allocation4 + $0x370] sm:$0xff]
    %v194 = vld [vmem:[#allocation4 + $0x378] sm:$0xff]
    %v195 = vld [vmem:[#allocation4 + $0x380] sm:$0xff]
    %v196 = vld [vmem:[#allocation4 + $0x388] sm:$0xff]
    %v197 = vld [vmem:[#allocation4 + $0x390] sm:$0xff]
    %v198 = vld [vmem:[#allocation4 + $0x398] sm:$0xff]
    %v199 = vld [vmem:[#allocation4 + $0x3a0] sm:$0xff]
    %v200 = vld [vmem:[#allocation4 + $0x3a8] sm:$0xff]
    %v201 = vld [vmem:[#allocation4 + $0x3b0] sm:$0xff]
    %v202 = vld [vmem:[#allocation4 + $0x3b8] sm:$0xff]
    %v203 = vld [vmem:[#allocation4 + $0x3c0] sm:$0xff]
    %v204 = vld [vmem:[#allocation4 + $0x3c8] sm:$0xff]
    %v205 = vld [vmem:[#allocation4 + $0x3d0] sm:$0xff]
    %v206 = vld [vmem:[#allocation4 + $0x3d8] sm:$0xff]
    %v207 = vld [vmem:[#allocation4 + $0x3e0] sm:$0xff]
    %v208 = vld [vmem:[#allocation4 + $0x3e8] sm:$0xff]
    %v209 = vld [vmem:[#allocation4 + $0x3f0] sm:$0xff]
    %v210 = vld [vmem:[#allocation4 + $0x3f8] sm:$0xff]
    %v211 = vld [vmem:[#allocation4 + $0x400] sm:$0xff]
    %v212 = vld [vmem:[#allocation4 + $0x408] sm:$0xff]
    %v213 = vld [vmem:[#allocation4 + $0x410] sm:$0xff]
    %v214 = vld [vmem:[#allocation4 + $0x418] sm:$0xff]
    %v215 = vld [vmem:[#allocation4 + $0x420] sm:$0xff]
    %v216 = vld [vmem:[#allocation4 + $0x428] sm:$0xff]
    %v217 = vld [vmem:[#allocation4 + $0x430] sm:$0xff]
    %v218 = vld [vmem:[#allocation4 + $0x438] sm:$0xff]
    %v219 = vld [vmem:[#allocation4 + $0x440] sm:$0xff]
    %v220 = vld [vmem:[#allocation4 + $0x448] sm:$0xff]
    %v221 = vld [vmem:[#allocation4 + $0x450] sm:$0xff]
    %v222 = vld [vmem:[#allocation4 + $0x458] sm:$0xff]
    %v223 = vld [vmem:[#allocation4 + $0x460] sm:$0xff]
    %v224 = vld [vmem:[#allocation4 + $0x468] sm:$0xff]
    %v225 = vld [vmem:[#allocation4 + $0x470] sm:$0xff]
    %v226 = vld [vmem:[#allocation4 + $0x478] sm:$0xff]
    %v227 = vld [vmem:[#allocation4 + $0x480] sm:$0xff]
    %v228 = vld [vmem:[#allocation4 + $0x488] sm:$0xff]
    %v229 = vld [vmem:[#allocation4 + $0x490] sm:$0xff]
    %v230 = vld [vmem:[#allocation4 + $0x498] sm:$0xff]
    %v231 = vld [vmem:[#allocation4 + $0x4a0] sm:$0xff]
    %v232 = vld [vmem:[#allocation4 + $0x4a8] sm:$0xff]
    %v233 = vld [vmem:[#allocation4 + $0x4b0] sm:$0xff]
    %v234 = vld [vmem:[#allocation4 + $0x4b8] sm:$0xff]
    %v235 = vld [vmem:[#allocation4 + $0x4c0] sm:$0xff]
    %v236 = vld [vmem:[#allocation4 + $0x4c8] sm:$0xff]
    %v237 = vld [vmem:[#allocation4 + $0x4d0] sm:$0xff]
    %v238 = vld [vmem:[#allocation4 + $0x4d8] sm:$0xff]
    %v239 = vld [vmem:[#allocation4 + $0x4e0] sm:$0xff]
    %v240 = vld [vmem:[#allocation4 + $0x4e8] sm:$0xff]
    %v241 = vld [vmem:[#allocation4 + $0x4f0] sm:$0xff]
    %v242 = vld [vmem:[#allocation4 + $0x4f8] sm:$0xff]
    %v243 = vld [vmem:[#allocation4 + $0x500] sm:$0xff]
    %v244 = vld [vmem:[#allocation4 + $0x508] sm:$0xff]
    %v245 = vld [vmem:[#allocation4 + $0x510] sm:$0xff]
    %v246 = vld [vmem:[#allocation4 + $0x518] sm:$0xff]
    %v247 = vld [vmem:[#allocation4 + $0x520] sm:$0xff]
    %v248 = vld [vmem:[#allocation4 + $0x528] sm:$0xff]
    %v249 = vld [vmem:[#allocation4 + $0x530] sm:$0xff]
    %v250 = vld [vmem:[#allocation4 + $0x538] sm:$0xff]
    %v251 = vld [vmem:[#allocation4 + $0x540] sm:$0xff]
    %v252 = vld [vmem:[#allocation4 + $0x548] sm:$0xff]
    %v253 = vld [vmem:[#allocation4 + $0x550] sm:$0xff]
    %v254 = vld [vmem:[#allocation4 + $0x558] sm:$0xff]
    %v255 = vld [vmem:[#allocation4 + $0x560] sm:$0xff]
    %v256 = vld [vmem:[#allocation4 + $0x568] sm:$0xff]
    %v257 = vld [vmem:[#allocation4 + $0x570] sm:$0xff]
    %v258 = vld [vmem:[#allocation4 + $0x578] sm:$0xff]
    %v259 = vld [vmem:[#allocation4 + $0x580] sm:$0xff]
    %v260 = vld [vmem:[#allocation4 + $0x588] sm:$0xff]
    %v261 = vld [vmem:[#allocation4 + $0x590] sm:$0xff]
    %v262 = vld [vmem:[#allocation4 + $0x598] sm:$0xff]
    %v263 = vld [vmem:[#allocation4 + $0x5a0] sm:$0xff]
    %v264 = vld [vmem:[#allocation4 + $0x5a8] sm:$0xff]
    %v265 = vld [vmem:[#allocation4 + $0x5b0] sm:$0xff]
    %v266 = vld [vmem:[#allocation4 + $0x5b8] sm:$0xff]
    %v267 = vld [vmem:[#allocation4 + $0x5c0] sm:$0xff]
    %v268 = vld [vmem:[#allocation4 + $0x5c8] sm:$0xff]
    %v269 = vld [vmem:[#allocation4 + $0x5d0] sm:$0xff]
    %v270 = vld [vmem:[#allocation4 + $0x5d8] sm:$0xff]
    %v271 = vld [vmem:[#allocation4 + $0x5e0] sm:$0xff]
    %v272 = vld [vmem:[#allocation4 + $0x5e8] sm:$0xff]
    %v273 = vld [vmem:[#allocation4 + $0x5f0] sm:$0xff]
    %v274 = vld [vmem:[#allocation4 + $0x5f8] sm:$0xff]
    %v275 = vld [vmem:[#allocation4 + $0x600] sm:$0xff]
    %v276 = vld [vmem:[#allocation4 + $0x608] sm:$0xff]
    %v277 = vld [vmem:[#allocation4 + $0x610] sm:$0xff]
    %v278 = vld [vmem:[#allocation4 + $0x618] sm:$0xff]
    %v279 = vld [vmem:[%s2] sm:$0xf]
    %v281 = vlaneseq
    %v282 = vshrl.u32 %v281, 7
    %v283 = vsub.s32 0, %v282
    %v284 = vrot.slane %v279, %v283
    %v285 = vlaneseq
    %v286 = vshrl.u32 %v285, 7
    %v287 = vsub.s32 1, %v286
    %v288 = vrot.slane %v279, %v287
    %v289 = vlaneseq
    %v290 = vshrl.u32 %v289, 7
    %v291 = vsub.s32 2, %v290
    %v292 = vrot.slane %v279, %v291
    %v293 = vlaneseq
    %v294 = vshrl.u32 %v293, 7
    %v295 = vsub.s32 3, %v294
    %v296 = vrot.slane %v279, %v295
    %v497 = vunpack.c.l.b16 %v83
    %v498 = vunpack.c.h.b16 %v83
    %v499 = vunpack.c.l.b16 %v84
    %v500 = vunpack.c.h.b16 %v84
    %v501 = vunpack.c.l.b16 %v85
    %v502 = vunpack.c.h.b16 %v85
    %v503 = vunpack.c.l.b16 %v86
    %v504 = vunpack.c.h.b16 %v86
    %v505 = vunpack.c.l.b16 %v87
    %v506 = vunpack.c.h.b16 %v87
    %v507 = vunpack.c.l.b16 %v88
    %v508 = vunpack.c.h.b16 %v88
    %v509 = vunpack.c.l.b16 %v89
    %v510 = vunpack.c.h.b16 %v89
    %v511 = vunpack.c.l.b16 %v90
    %v512 = vunpack.c.h.b16 %v90
    %v513 = vunpack.c.l.b16 %v91
    %v514 = vunpack.c.h.b16 %v91
    %v515 = vunpack.c.l.b16 %v92
    %v516 = vunpack.c.h.b16 %v92
    %v517 = vunpack.c.l.b16 %v93
    %v518 = vunpack.c.h.b16 %v93
    %v519 = vunpack.c.l.b16 %v94
    %v520 = vunpack.c.h.b16 %v94
    %v521 = vunpack.c.l.b16 %v95
    %v522 = vunpack.c.h.b16 %v95
    %v523 = vunpack.c.l.b16 %v96
    %v524 = vunpack.c.h.b16 %v96
    %v525 = vunpack.c.l.b16 %v97
    %v526 = vunpack.c.h.b16 %v97
    %v527 = vunpack.c.l.b16 %v98
    %v528 = vunpack.c.h.b16 %v98
    %v529 = vunpack.c.l.b16 %v99
    %v530 = vunpack.c.h.b16 %v99
    %v531 = vunpack.c.l.b16 %v100
    %v532 = vunpack.c.h.b16 %v100
    %v533 = vunpack.c.l.b16 %v101
    %v534 = vunpack.c.h.b16 %v101
    %v535 = vunpack.c.l.b16 %v102
    %v536 = vunpack.c.h.b16 %v102
    %v537 = vunpack.c.l.b16 %v103
    %v538 = vunpack.c.h.b16 %v103
    %v539 = vunpack.c.l.b16 %v104
    %v540 = vunpack.c.h.b16 %v104
    %v541 = vunpack.c.l.b16 %v105
    %v542 = vunpack.c.h.b16 %v105
    %v543 = vunpack.c.l.b16 %v106
    %v544 = vunpack.c.h.b16 %v106
    %v545 = vunpack.c.l.b16 %v107
    %v546 = vunpack.c.h.b16 %v107
    %v547 = vunpack.c.l.b16 %v108
    %v548 = vunpack.c.h.b16 %v108
    %v549 = vunpack.c.l.b16 %v109
    %v550 = vunpack.c.h.b16 %v109
    %v551 = vunpack.c.l.b16 %v110
    %v552 = vunpack.c.h.b16 %v110
    %v553 = vunpack.c.l.b16 %v111
    %v554 = vunpack.c.h.b16 %v111
    %v555 = vunpack.c.l.b16 %v112
    %v556 = vunpack.c.h.b16 %v112
    %v557 = vunpack.c.l.b16 %v113
    %v558 = vunpack.c.h.b16 %v113
    %v559 = vunpack.c.l.b16 %v114
    %v560 = vunpack.c.h.b16 %v114
    %v561 = vunpack.c.l.b16 %v115
    %v562 = vunpack.c.h.b16 %v115
    %v563 = vunpack.c.l.b16 %v116
    %v564 = vunpack.c.h.b16 %v116
    %v565 = vunpack.c.l.b16 %v117
    %v566 = vunpack.c.h.b16 %v117
    %v567 = vunpack.c.l.b16 %v118
    %v568 = vunpack.c.h.b16 %v118
    %v569 = vunpack.c.l.b16 %v119
    %v570 = vunpack.c.h.b16 %v119
    %v571 = vunpack.c.l.b16 %v120
    %v572 = vunpack.c.h.b16 %v120
    %v573 = vunpack.c.l.b16 %v121
    %v574 = vunpack.c.h.b16 %v121
    %v575 = vunpack.c.l.b16 %v122
    %v576 = vunpack.c.h.b16 %v122
    %v577 = vunpack.c.l.b16 %v123
    %v578 = vunpack.c.h.b16 %v123
    %v579 = vunpack.c.l.b16 %v124
    %v580 = vunpack.c.h.b16 %v124
    %v581 = vunpack.c.l.b16 %v125
    %v582 = vunpack.c.h.b16 %v125
    %v583 = vunpack.c.l.b16 %v126
    %v584 = vunpack.c.h.b16 %v126
    %v585 = vunpack.c.l.b16 %v127
    %v586 = vunpack.c.h.b16 %v127
    %v587 = vunpack.c.l.b16 %v128
    %v588 = vunpack.c.h.b16 %v128
    %v589 = vunpack.c.l.b16 %v129
    %v590 = vunpack.c.h.b16 %v129
    %v591 = vunpack.c.l.b16 %v130
    %v592 = vunpack.c.h.b16 %v130
    %v593 = vunpack.c.l.b16 %v131
    %v594 = vunpack.c.h.b16 %v131
    %v595 = vunpack.c.l.b16 %v132
    %v596 = vunpack.c.h.b16 %v132
    %v597 = vunpack.c.l.b16 %v133
    %v598 = vunpack.c.h.b16 %v133
    %v599 = vunpack.c.l.b16 %v134
    %v600 = vunpack.c.h.b16 %v134
    %v601 = vunpack.c.l.b16 %v135
    %v602 = vunpack.c.h.b16 %v135
    %v603 = vunpack.c.l.b16 %v136
    %v604 = vunpack.c.h.b16 %v136
    %v605 = vunpack.c.l.b16 %v137
    %v606 = vunpack.c.h.b16 %v137
    %v607 = vunpack.c.l.b16 %v138
    %v608 = vunpack.c.h.b16 %v138
    %v609 = vunpack.c.l.b16 %v139
    %v610 = vunpack.c.h.b16 %v139
    %v611 = vunpack.c.l.b16 %v140
    %v612 = vunpack.c.h.b16 %v140
    %v613 = vunpack.c.l.b16 %v141
    %v614 = vunpack.c.h.b16 %v141
    %v615 = vunpack.c.l.b16 %v142
    %v616 = vunpack.c.h.b16 %v142
    %v617 = vunpack.c.l.b16 %v143
    %v618 = vunpack.c.h.b16 %v143
    %v619 = vunpack.c.l.b16 %v144
    %v620 = vunpack.c.h.b16 %v144
    %v621 = vunpack.c.l.b16 %v145
    %v622 = vunpack.c.h.b16 %v145
    %v623 = vunpack.c.l.b16 %v146
    %v624 = vunpack.c.h.b16 %v146
    %v625 = vunpack.c.l.b16 %v147
    %v626 = vunpack.c.h.b16 %v147
    %v627 = vunpack.c.l.b16 %v148
    %v628 = vunpack.c.h.b16 %v148
    %v629 = vunpack.c.l.b16 %v149
    %v630 = vunpack.c.h.b16 %v149
    %v631 = vunpack.c.l.b16 %v150
    %v632 = vunpack.c.h.b16 %v150
    %v633 = vunpack.c.l.b16 %v151
    %v634 = vunpack.c.h.b16 %v151
    %v635 = vunpack.c.l.b16 %v152
    %v636 = vunpack.c.h.b16 %v152
    %v637 = vunpack.c.l.b16 %v153
    %v638 = vunpack.c.h.b16 %v153
    %v639 = vunpack.c.l.b16 %v154
    %v640 = vunpack.c.h.b16 %v154
    %v641 = vunpack.c.l.b16 %v155
    %v642 = vunpack.c.h.b16 %v155
    %v643 = vunpack.c.l.b16 %v156
    %v644 = vunpack.c.h.b16 %v156
    %v645 = vunpack.c.l.b16 %v157
    %v646 = vunpack.c.h.b16 %v157
    %v647 = vunpack.c.l.b16 %v158
    %v648 = vunpack.c.h.b16 %v158
    %v649 = vunpack.c.l.b16 %v159
    %v650 = vunpack.c.h.b16 %v159
    %v651 = vunpack.c.l.b16 %v160
    %v652 = vunpack.c.h.b16 %v160
    %v653 = vunpack.c.l.b16 %v161
    %v654 = vunpack.c.h.b16 %v161
    %v655 = vunpack.c.l.b16 %v162
    %v656 = vunpack.c.h.b16 %v162
    %v657 = vunpack.c.l.b16 %v163
    %v658 = vunpack.c.h.b16 %v163
    %v659 = vunpack.c.l.b16 %v164
    %v660 = vunpack.c.h.b16 %v164
    %v661 = vunpack.c.l.b16 %v165
    %v662 = vunpack.c.h.b16 %v165
    %v663 = vunpack.c.l.b16 %v166
    %v664 = vunpack.c.h.b16 %v166
    %v665 = vunpack.c.l.b16 %v167
    %v666 = vunpack.c.h.b16 %v167
    %v667 = vunpack.c.l.b16 %v168
    %v668 = vunpack.c.h.b16 %v168
    %v669 = vunpack.c.l.b16 %v169
    %v670 = vunpack.c.h.b16 %v169
    %v671 = vunpack.c.l.b16 %v170
    %v672 = vunpack.c.h.b16 %v170
    %v673 = vunpack.c.l.b16 %v171
    %v674 = vunpack.c.h.b16 %v171
    %v675 = vunpack.c.l.b16 %v172
    %v676 = vunpack.c.h.b16 %v172
    %v677 = vunpack.c.l.b16 %v173
    %v678 = vunpack.c.h.b16 %v173
    %v679 = vunpack.c.l.b16 %v174
    %v680 = vunpack.c.h.b16 %v174
    %v681 = vunpack.c.l.b16 %v175
    %v682 = vunpack.c.h.b16 %v175
    %v683 = vunpack.c.l.b16 %v176
    %v684 = vunpack.c.h.b16 %v176
    %v685 = vunpack.c.l.b16 %v177
    %v686 = vunpack.c.h.b16 %v177
    %v687 = vunpack.c.l.b16 %v178
    %v688 = vunpack.c.h.b16 %v178
    %v689 = vunpack.c.l.b16 %v179
    %v690 = vunpack.c.h.b16 %v179
    %v691 = vunpack.c.l.b16 %v180
    %v692 = vunpack.c.h.b16 %v180
    %v693 = vunpack.c.l.b16 %v181
    %v694 = vunpack.c.h.b16 %v181
    %v695 = vunpack.c.l.b16 %v182
    %v696 = vunpack.c.h.b16 %v182
    %v697 = vunpack.c.l.b16 %v183
    %v698 = vunpack.c.h.b16 %v183
    %v699 = vunpack.c.l.b16 %v184
    %v700 = vunpack.c.h.b16 %v184
    %v701 = vunpack.c.l.b16 %v185
    %v702 = vunpack.c.h.b16 %v185
    %v703 = vunpack.c.l.b16 %v186
    %v704 = vunpack.c.h.b16 %v186
    %v705 = vunpack.c.l.b16 %v187
    %v706 = vunpack.c.h.b16 %v187
    %v707 = vunpack.c.l.b16 %v188
    %v708 = vunpack.c.h.b16 %v188
    %v709 = vunpack.c.l.b16 %v189
    %v710 = vunpack.c.h.b16 %v189
    %v711 = vunpack.c.l.b16 %v190
    %v712 = vunpack.c.h.b16 %v190
    %v713 = vunpack.c.l.b16 %v191
    %v714 = vunpack.c.h.b16 %v191
    %v715 = vunpack.c.l.b16 %v192
    %v716 = vunpack.c.h.b16 %v192
    %v717 = vunpack.c.l.b16 %v193
    %v718 = vunpack.c.h.b16 %v193
    %v719 = vunpack.c.l.b16 %v194
    %v720 = vunpack.c.h.b16 %v194
    %v721 = vunpack.c.l.b16 %v195
    %v722 = vunpack.c.h.b16 %v195
    %v723 = vunpack.c.l.b16 %v196
    %v724 = vunpack.c.h.b16 %v196
    %v725 = vunpack.c.l.b16 %v197
    %v726 = vunpack.c.h.b16 %v197
    %v727 = vunpack.c.l.b16 %v198
    %v728 = vunpack.c.h.b16 %v198
    %v729 = vunpack.c.l.b16 %v199
    %v730 = vunpack.c.h.b16 %v199
    %v731 = vunpack.c.l.b16 %v200
    %v732 = vunpack.c.h.b16 %v200
    %v733 = vunpack.c.l.b16 %v201
    %v734 = vunpack.c.h.b16 %v201
    %v735 = vunpack.c.l.b16 %v202
    %v736 = vunpack.c.h.b16 %v202
    %v737 = vunpack.c.l.b16 %v203
    %v738 = vunpack.c.h.b16 %v203
    %v739 = vunpack.c.l.b16 %v204
    %v740 = vunpack.c.h.b16 %v204
    %v741 = vunpack.c.l.b16 %v205
    %v742 = vunpack.c.h.b16 %v205
    %v743 = vunpack.c.l.b16 %v206
    %v744 = vunpack.c.h.b16 %v206
    %v745 = vunpack.c.l.b16 %v207
    %v746 = vunpack.c.h.b16 %v207
    %v747 = vunpack.c.l.b16 %v208
    %v748 = vunpack.c.h.b16 %v208
    %v749 = vunpack.c.l.b16 %v209
    %v750 = vunpack.c.h.b16 %v209
    %v751 = vunpack.c.l.b16 %v210
    %v752 = vunpack.c.h.b16 %v210
    %v753 = vunpack.c.l.b16 %v211
    %v754 = vunpack.c.h.b16 %v211
    %v755 = vunpack.c.l.b16 %v212
    %v756 = vunpack.c.h.b16 %v212
    %v757 = vunpack.c.l.b16 %v213
    %v758 = vunpack.c.h.b16 %v213
    %v759 = vunpack.c.l.b16 %v214
    %v760 = vunpack.c.h.b16 %v214
    %v761 = vunpack.c.l.b16 %v215
    %v762 = vunpack.c.h.b16 %v215
    %v763 = vunpack.c.l.b16 %v216
    %v764 = vunpack.c.h.b16 %v216
    %v765 = vunpack.c.l.b16 %v217
    %v766 = vunpack.c.h.b16 %v217
    %v767 = vunpack.c.l.b16 %v218
    %v768 = vunpack.c.h.b16 %v218
    %v769 = vunpack.c.l.b16 %v219
    %v770 = vunpack.c.h.b16 %v219
    %v771 = vunpack.c.l.b16 %v220
    %v772 = vunpack.c.h.b16 %v220
    %v773 = vunpack.c.l.b16 %v221
    %v774 = vunpack.c.h.b16 %v221
    %v775 = vunpack.c.l.b16 %v222
    %v776 = vunpack.c.h.b16 %v222
    %v777 = vunpack.c.l.b16 %v223
    %v778 = vunpack.c.h.b16 %v223
    %v779 = vunpack.c.l.b16 %v224
    %v780 = vunpack.c.h.b16 %v224
    %v781 = vunpack.c.l.b16 %v225
    %v782 = vunpack.c.h.b16 %v225
    %v783 = vunpack.c.l.b16 %v226
    %v784 = vunpack.c.h.b16 %v226
    %v785 = vunpack.c.l.b16 %v227
    %v786 = vunpack.c.h.b16 %v227
    %v787 = vunpack.c.l.b16 %v228
    %v788 = vunpack.c.h.b16 %v228
    %v789 = vunpack.c.l.b16 %v229
    %v790 = vunpack.c.h.b16 %v229
    %v791 = vunpack.c.l.b16 %v230
    %v792 = vunpack.c.h.b16 %v230
    %v793 = vunpack.c.l.b16 %v231
    %v794 = vunpack.c.h.b16 %v231
    %v795 = vunpack.c.l.b16 %v232
    %v796 = vunpack.c.h.b16 %v232
    %v797 = vunpack.c.l.b16 %v233
    %v798 = vunpack.c.h.b16 %v233
    %v799 = vunpack.c.l.b16 %v234
    %v800 = vunpack.c.h.b16 %v234
    %v801 = vunpack.c.l.b16 %v235
    %v802 = vunpack.c.h.b16 %v235
    %v803 = vunpack.c.l.b16 %v236
    %v804 = vunpack.c.h.b16 %v236
    %v805 = vunpack.c.l.b16 %v237
    %v806 = vunpack.c.h.b16 %v237
    %v807 = vunpack.c.l.b16 %v238
    %v808 = vunpack.c.h.b16 %v238
    %v809 = vunpack.c.l.b16 %v239
    %v810 = vunpack.c.h.b16 %v239
    %v811 = vunpack.c.l.b16 %v240
    %v812 = vunpack.c.h.b16 %v240
    %v813 = vunpack.c.l.b16 %v241
    %v814 = vunpack.c.h.b16 %v241
    %v815 = vunpack.c.l.b16 %v242
    %v816 = vunpack.c.h.b16 %v242
    %v817 = vunpack.c.l.b16 %v243
    %v818 = vunpack.c.h.b16 %v243
    %v819 = vunpack.c.l.b16 %v244
    %v820 = vunpack.c.h.b16 %v244
    %v821 = vunpack.c.l.b16 %v245
    %v822 = vunpack.c.h.b16 %v245
    %v823 = vunpack.c.l.b16 %v246
    %v824 = vunpack.c.h.b16 %v246
    %v825 = vunpack.c.l.b16 %v247
    %v826 = vunpack.c.h.b16 %v247
    %v827 = vunpack.c.l.b16 %v248
    %v828 = vunpack.c.h.b16 %v248
    %v829 = vunpack.c.l.b16 %v249
    %v830 = vunpack.c.h.b16 %v249
    %v831 = vunpack.c.l.b16 %v250
    %v832 = vunpack.c.h.b16 %v250
    %v833 = vunpack.c.l.b16 %v251
    %v834 = vunpack.c.h.b16 %v251
    %v835 = vunpack.c.l.b16 %v252
    %v836 = vunpack.c.h.b16 %v252
    %v837 = vunpack.c.l.b16 %v253
    %v838 = vunpack.c.h.b16 %v253
    %v839 = vunpack.c.l.b16 %v254
    %v840 = vunpack.c.h.b16 %v254
    %v841 = vunpack.c.l.b16 %v255
    %v842 = vunpack.c.h.b16 %v255
    %v843 = vunpack.c.l.b16 %v256
    %v844 = vunpack.c.h.b16 %v256
    %v845 = vunpack.c.l.b16 %v257
    %v846 = vunpack.c.h.b16 %v257
    %v847 = vunpack.c.l.b16 %v258
    %v848 = vunpack.c.h.b16 %v258
    %v849 = vunpack.c.l.b16 %v259
    %v850 = vunpack.c.h.b16 %v259
    %v851 = vunpack.c.l.b16 %v260
    %v852 = vunpack.c.h.b16 %v260
    %v853 = vunpack.c.l.b16 %v261
    %v854 = vunpack.c.h.b16 %v261
    %v855 = vunpack.c.l.b16 %v262
    %v856 = vunpack.c.h.b16 %v262
    %v857 = vunpack.c.l.b16 %v263
    %v858 = vunpack.c.h.b16 %v263
    %v859 = vunpack.c.l.b16 %v264
    %v860 = vunpack.c.h.b16 %v264
    %v861 = vunpack.c.l.b16 %v265
    %v862 = vunpack.c.h.b16 %v265
    %v863 = vunpack.c.l.b16 %v266
    %v864 = vunpack.c.h.b16 %v266
    %v865 = vunpack.c.l.b16 %v267
    %v866 = vunpack.c.h.b16 %v267
    %v867 = vunpack.c.l.b16 %v268
    %v868 = vunpack.c.h.b16 %v268
    %v869 = vunpack.c.l.b16 %v269
    %v870 = vunpack.c.h.b16 %v269
    %v871 = vunpack.c.l.b16 %v270
    %v872 = vunpack.c.h.b16 %v270
    %v873 = vunpack.c.l.b16 %v271
    %v874 = vunpack.c.h.b16 %v271
    %v875 = vunpack.c.l.b16 %v272
    %v876 = vunpack.c.h.b16 %v272
    %v877 = vunpack.c.l.b16 %v273
    %v878 = vunpack.c.h.b16 %v273
    %v879 = vunpack.c.l.b16 %v274
    %v880 = vunpack.c.h.b16 %v274
    %v881 = vunpack.c.l.b16 %v275
    %v882 = vunpack.c.h.b16 %v275
    %v883 = vunpack.c.l.b16 %v276
    %v884 = vunpack.c.h.b16 %v276
    %v885 = vunpack.c.l.b16 %v277
    %v886 = vunpack.c.h.b16 %v277
    %v887 = vunpack.c.l.b16 %v278
    %v888 = vunpack.c.h.b16 %v278
    %v889 = vpack.c.b16 %v501, %v497
    %v890 = vpack.c.b16 %v502, %v498
    %v891 = vpack.c.b16 %v503, %v499
    %v892 = vpack.c.b16 %v504, %v500
    %v893 = vpack.c.b16 %v509, %v505
    %v894 = vpack.c.b16 %v510, %v506
    %v895 = vpack.c.b16 %v511, %v507
    %v896 = vpack.c.b16 %v512, %v508
    %v897 = vpack.c.b16 %v517, %v513
    %v898 = vpack.c.b16 %v518, %v514
    %v899 = vpack.c.b16 %v519, %v515
    %v900 = vpack.c.b16 %v520, %v516
    %v901 = vpack.c.b16 %v525, %v521
    %v902 = vpack.c.b16 %v526, %v522
    %v903 = vpack.c.b16 %v527, %v523
    %v904 = vpack.c.b16 %v528, %v524
    %v905 = vpack.c.b16 %v533, %v529
    %v906 = vpack.c.b16 %v534, %v530
    %v907 = vpack.c.b16 %v535, %v531
    %v908 = vpack.c.b16 %v536, %v532
    %v909 = vpack.c.b16 %v541, %v537
    %v910 = vpack.c.b16 %v542, %v538
    %v911 = vpack.c.b16 %v543, %v539
    %v912 = vpack.c.b16 %v544, %v540
    %v913 = vpack.c.b16 %v549, %v545
    %v914 = vpack.c.b16 %v550, %v546
    %v915 = vpack.c.b16 %v551, %v547
    %v916 = vpack.c.b16 %v552, %v548
    %v917 = vpack.c.b16 %v557, %v553
    %v918 = vpack.c.b16 %v558, %v554
    %v919 = vpack.c.b16 %v559, %v555
    %v920 = vpack.c.b16 %v560, %v556
    %v921 = vpack.c.b16 %v565, %v561
    %v922 = vpack.c.b16 %v566, %v562
    %v923 = vpack.c.b16 %v567, %v563
    %v924 = vpack.c.b16 %v568, %v564
    %v925 = vpack.c.b16 %v573, %v569
    %v926 = vpack.c.b16 %v574, %v570
    %v927 = vpack.c.b16 %v575, %v571
    %v928 = vpack.c.b16 %v576, %v572
    %v929 = vpack.c.b16 %v581, %v577
    %v930 = vpack.c.b16 %v582, %v578
    %v931 = vpack.c.b16 %v583, %v579
    %v932 = vpack.c.b16 %v584, %v580
    %v933 = vpack.c.b16 %v589, %v585
    %v934 = vpack.c.b16 %v590, %v586
    %v935 = vpack.c.b16 %v591, %v587
    %v936 = vpack.c.b16 %v592, %v588
    %v937 = vpack.c.b16 %v597, %v593
    %v938 = vpack.c.b16 %v598, %v594
    %v939 = vpack.c.b16 %v599, %v595
    %v940 = vpack.c.b16 %v600, %v596
    %v941 = vpack.c.b16 %v605, %v601
    %v942 = vpack.c.b16 %v606, %v602
    %v943 = vpack.c.b16 %v607, %v603
    %v944 = vpack.c.b16 %v608, %v604
    %v945 = vpack.c.b16 %v613, %v609
    %v946 = vpack.c.b16 %v614, %v610
    %v947 = vpack.c.b16 %v615, %v611
    %v948 = vpack.c.b16 %v616, %v612
    %v949 = vpack.c.b16 %v621, %v617
    %v950 = vpack.c.b16 %v622, %v618
    %v951 = vpack.c.b16 %v623, %v619
    %v952 = vpack.c.b16 %v624, %v620
    %v953 = vpack.c.b16 %v629, %v625
    %v954 = vpack.c.b16 %v630, %v626
    %v955 = vpack.c.b16 %v631, %v627
    %v956 = vpack.c.b16 %v632, %v628
    %v957 = vpack.c.b16 %v637, %v633
    %v958 = vpack.c.b16 %v638, %v634
    %v959 = vpack.c.b16 %v639, %v635
    %v960 = vpack.c.b16 %v640, %v636
    %v961 = vpack.c.b16 %v645, %v641
    %v962 = vpack.c.b16 %v646, %v642
    %v963 = vpack.c.b16 %v647, %v643
    %v964 = vpack.c.b16 %v648, %v644
    %v965 = vpack.c.b16 %v653, %v649
    %v966 = vpack.c.b16 %v654, %v650
    %v967 = vpack.c.b16 %v655, %v651
    %v968 = vpack.c.b16 %v656, %v652
    %v969 = vpack.c.b16 %v661, %v657
    %v970 = vpack.c.b16 %v662, %v658
    %v971 = vpack.c.b16 %v663, %v659
    %v972 = vpack.c.b16 %v664, %v660
    %v973 = vpack.c.b16 %v669, %v665
    %v974 = vpack.c.b16 %v670, %v666
    %v975 = vpack.c.b16 %v671, %v667
    %v976 = vpack.c.b16 %v672, %v668
    %v977 = vpack.c.b16 %v677, %v673
    %v978 = vpack.c.b16 %v678, %v674
    %v979 = vpack.c.b16 %v679, %v675
    %v980 = vpack.c.b16 %v680, %v676
    %v981 = vpack.c.b16 %v685, %v681
    %v982 = vpack.c.b16 %v686, %v682
    %v983 = vpack.c.b16 %v687, %v683
    %v984 = vpack.c.b16 %v688, %v684
    %v985 = vpack.c.b16 %v693, %v689
    %v986 = vpack.c.b16 %v694, %v690
    %v987 = vpack.c.b16 %v695, %v691
    %v988 = vpack.c.b16 %v696, %v692
    %v989 = vpack.c.b16 %v701, %v697
    %v990 = vpack.c.b16 %v702, %v698
    %v991 = vpack.c.b16 %v703, %v699
    %v992 = vpack.c.b16 %v704, %v700
    %v993 = vpack.c.b16 %v709, %v705
    %v994 = vpack.c.b16 %v710, %v706
    %v995 = vpack.c.b16 %v711, %v707
    %v996 = vpack.c.b16 %v712, %v708
    %v997 = vpack.c.b16 %v717, %v713
    %v998 = vpack.c.b16 %v718, %v714
    %v999 = vpack.c.b16 %v719, %v715
    %v1000 = vpack.c.b16 %v720, %v716
    %v1001 = vpack.c.b16 %v725, %v721
    %v1002 = vpack.c.b16 %v726, %v722
    %v1003 = vpack.c.b16 %v727, %v723
    %v1004 = vpack.c.b16 %v728, %v724
    %v1005 = vpack.c.b16 %v733, %v729
    %v1006 = vpack.c.b16 %v734, %v730
    %v1007 = vpack.c.b16 %v735, %v731
    %v1008 = vpack.c.b16 %v736, %v732
    %v1009 = vpack.c.b16 %v741, %v737
    %v1010 = vpack.c.b16 %v742, %v738
    %v1011 = vpack.c.b16 %v743, %v739
    %v1012 = vpack.c.b16 %v744, %v740
    %v1013 = vpack.c.b16 %v749, %v745
    %v1014 = vpack.c.b16 %v750, %v746
    %v1015 = vpack.c.b16 %v751, %v747
    %v1016 = vpack.c.b16 %v752, %v748
    %v1017 = vpack.c.b16 %v757, %v753
    %v1018 = vpack.c.b16 %v758, %v754
    %v1019 = vpack.c.b16 %v759, %v755
    %v1020 = vpack.c.b16 %v760, %v756
    %v1021 = vpack.c.b16 %v765, %v761
    %v1022 = vpack.c.b16 %v766, %v762
    %v1023 = vpack.c.b16 %v767, %v763
    %v1024 = vpack.c.b16 %v768, %v764
    %v1025 = vpack.c.b16 %v773, %v769
    %v1026 = vpack.c.b16 %v774, %v770
    %v1027 = vpack.c.b16 %v775, %v771
    %v1028 = vpack.c.b16 %v776, %v772
    %v1029 = vpack.c.b16 %v781, %v777
    %v1030 = vpack.c.b16 %v782, %v778
    %v1031 = vpack.c.b16 %v783, %v779
    %v1032 = vpack.c.b16 %v784, %v780
    %v1033 = vpack.c.b16 %v789, %v785
    %v1034 = vpack.c.b16 %v790, %v786
    %v1035 = vpack.c.b16 %v791, %v787
    %v1036 = vpack.c.b16 %v792, %v788
    %v1037 = vpack.c.b16 %v797, %v793
    %v1038 = vpack.c.b16 %v798, %v794
    %v1039 = vpack.c.b16 %v799, %v795
    %v1040 = vpack.c.b16 %v800, %v796
    %v1041 = vpack.c.b16 %v805, %v801
    %v1042 = vpack.c.b16 %v806, %v802
    %v1043 = vpack.c.b16 %v807, %v803
    %v1044 = vpack.c.b16 %v808, %v804
    %v1045 = vpack.c.b16 %v813, %v809
    %v1046 = vpack.c.b16 %v814, %v810
    %v1047 = vpack.c.b16 %v815, %v811
    %v1048 = vpack.c.b16 %v816, %v812
    %v1049 = vpack.c.b16 %v821, %v817
    %v1050 = vpack.c.b16 %v822, %v818
    %v1051 = vpack.c.b16 %v823, %v819
    %v1052 = vpack.c.b16 %v824, %v820
    %v1053 = vpack.c.b16 %v829, %v825
    %v1054 = vpack.c.b16 %v830, %v826
    %v1055 = vpack.c.b16 %v831, %v827
    %v1056 = vpack.c.b16 %v832, %v828
    %v1057 = vpack.c.b16 %v837, %v833
    %v1058 = vpack.c.b16 %v838, %v834
    %v1059 = vpack.c.b16 %v839, %v835
    %v1060 = vpack.c.b16 %v840, %v836
    %v1061 = vpack.c.b16 %v845, %v841
    %v1062 = vpack.c.b16 %v846, %v842
    %v1063 = vpack.c.b16 %v847, %v843
    %v1064 = vpack.c.b16 %v848, %v844
    %v1065 = vpack.c.b16 %v853, %v849
    %v1066 = vpack.c.b16 %v854, %v850
    %v1067 = vpack.c.b16 %v855, %v851
    %v1068 = vpack.c.b16 %v856, %v852
    %v1069 = vpack.c.b16 %v861, %v857
    %v1070 = vpack.c.b16 %v862, %v858
    %v1071 = vpack.c.b16 %v863, %v859
    %v1072 = vpack.c.b16 %v864, %v860
    %v1073 = vpack.c.b16 %v869, %v865
    %v1074 = vpack.c.b16 %v870, %v866
    %v1075 = vpack.c.b16 %v871, %v867
    %v1076 = vpack.c.b16 %v872, %v868
    %v1077 = vpack.c.b16 %v877, %v873
    %v1078 = vpack.c.b16 %v878, %v874
    %v1079 = vpack.c.b16 %v879, %v875
    %v1080 = vpack.c.b16 %v880, %v876
    %v1081 = vpack.c.b16 %v885, %v881
    %v1082 = vpack.c.b16 %v886, %v882
    %v1083 = vpack.c.b16 %v887, %v883
    %v1084 = vpack.c.b16 %v888, %v884
    %vm1281 = vcmask 130048
    %v1283 = vsel %vm1281, %v82, 0
    %1285 = vmatprep.subr.bf16.mxu0 %v890
    %1286 = vmatpush1.bf16.msra.mxu0 %v889
    %1287 = vmatprep.subr.bf16.mxu0 %v894
    %1288 = vmatpush1.bf16.msra.mxu0 %v893
    %1289 = vmatprep.subr.bf16.mxu0 %v898
    %1290 = vmatpush1.bf16.msra.mxu0 %v897
    %1291 = vmatprep.subr.bf16.mxu0 %v902
    %1292 = vmatpush1.bf16.msra.mxu0 %v901
    %1293 = vmatprep.subr.bf16.mxu0 %v906
    %1294 = vmatpush1.bf16.msra.mxu0 %v905
    %1295 = vmatprep.subr.bf16.mxu0 %v910
    %1296 = vmatpush1.bf16.msra.mxu0 %v909
    %1297 = vmatprep.subr.bf16.mxu0 %v914
    %1298 = vmatpush1.bf16.msra.mxu0 %v913
    %1299 = vmatprep.subr.bf16.mxu0 %v918
    %1300 = vmatpush1.bf16.msra.mxu0 %v917
    %1301 = vmatprep.subr.bf16.mxu0 %v922
    %1302 = vmatpush1.bf16.msra.mxu0 %v921
    %1303 = vmatprep.subr.bf16.mxu0 %v926
    %1304 = vmatpush1.bf16.msra.mxu0 %v925
    %1305 = vmatprep.subr.bf16.mxu0 %v930
    %1306 = vmatpush1.bf16.msra.mxu0 %v929
    %1307 = vmatprep.subr.bf16.mxu0 %v934
    %1308 = vmatpush1.bf16.msra.mxu0 %v933
    %1309 = vmatprep.subr.bf16.mxu0 %v938
    %1310 = vmatpush1.bf16.msra.mxu0 %v937
    %1311 = vmatprep.subr.bf16.mxu0 %v942
    %1312 = vmatpush1.bf16.msra.mxu0 %v941
    %1313 = vmatprep.subr.bf16.mxu0 %v946
    %1314 = vmatpush1.bf16.msra.mxu0 %v945
    %1315 = vmatprep.subr.bf16.mxu0 %v950
    %1316 = vmatpush1.bf16.msra.mxu0 %v949
    %1317 = vmatprep.mubr.bf16.mxu0 %v77
    %1318 = vmatmul.mubr.bf16.gmra.mrb[0].mxu0 %v76
    %v1319 = vpop.f32.mrb[0].mxu0
    %v1320 = vadd.f32 %v284, %v1319
    %v1321 = vpop.f32.mrb[0].mxu0
    %v1322 = vadd.f32 %v288, %v1321
    %v1323 = vpop.f32.mrb[0].mxu0
    %v1324 = vadd.f32 %v284, %v1323
    %v1325 = vpop.f32.mrb[0].mxu0
    %v1326 = vadd.f32 %v288, %v1325
    %1327 = vdwg.mxu0
    %1328 = vmatprep.subr.bf16.mxu0 %v954
    %1329 = vmatpush1.bf16.msra.mxu0 %v953
    %1330 = vmatprep.subr.bf16.mxu0 %v958
    %1331 = vmatpush1.bf16.msra.mxu0 %v957
    %1332 = vmatprep.subr.bf16.mxu0 %v962
    %1333 = vmatpush1.bf16.msra.mxu0 %v961
    %1334 = vmatprep.subr.bf16.mxu0 %v966
    %1335 = vmatpush1.bf16.msra.mxu0 %v965
    %1336 = vmatprep.subr.bf16.mxu0 %v970
    %1337 = vmatpush1.bf16.msra.mxu0 %v969
    %1338 = vmatprep.subr.bf16.mxu0 %v974
    %1339 = vmatpush1.bf16.msra.mxu0 %v973
    %1340 = vmatprep.subr.bf16.mxu0 %v978
    %1341 = vmatpush1.bf16.msra.mxu0 %v977
    %1342 = vmatprep.subr.bf16.mxu0 %v982
    %1343 = vmatpush1.bf16.msra.mxu0 %v981
    %1344 = vmatprep.subr.bf16.mxu0 %v986
    %1345 = vmatpush1.bf16.msra.mxu0 %v985
    %1346 = vmatprep.subr.bf16.mxu0 %v990
    %1347 = vmatpush1.bf16.msra.mxu0 %v989
    %1348 = vmatprep.subr.bf16.mxu0 %v994
    %1349 = vmatpush1.bf16.msra.mxu0 %v993
    %1350 = vmatprep.subr.bf16.mxu0 %v998
    %1351 = vmatpush1.bf16.msra.mxu0 %v997
    %1352 = vmatprep.subr.bf16.mxu0 %v1002
    %1353 = vmatpush1.bf16.msra.mxu0 %v1001
    %1354 = vmatprep.subr.bf16.mxu0 %v1006
    %1355 = vmatpush1.bf16.msra.mxu0 %v1005
    %1356 = vmatprep.subr.bf16.mxu0 %v1010
    %1357 = vmatpush1.bf16.msra.mxu0 %v1009
    %1358 = vmatprep.subr.bf16.mxu0 %v1014
    %1359 = vmatpush1.bf16.msra.mxu0 %v1013
    %1360 = vmatprep.mubr.bf16.mxu0 %v79
    %1361 = vmatmul.mubr.bf16.gmra.mrb[0].mxu0 %v78
    %v1362 = vpop.f32.mrb[0].mxu0
    %v1363 = vadd.f32 %v1320, %v1362
    %v1364 = vpop.f32.mrb[0].mxu0
    %v1365 = vadd.f32 %v1322, %v1364
    %v1366 = vpop.f32.mrb[0].mxu0
    %v1367 = vadd.f32 %v1324, %v1366
    %v1368 = vpop.f32.mrb[0].mxu0
    %v1369 = vadd.f32 %v1326, %v1368
    %1370 = vdwg.mxu0
    %1371 = vmatprep.subr.bf16.mxu0 %v1018
    %1372 = vmatpush1.bf16.msra.mxu0 %v1017
    %1373 = vmatprep.subr.bf16.mxu0 %v1022
    %1374 = vmatpush1.bf16.msra.mxu0 %v1021
    %1375 = vmatprep.subr.bf16.mxu0 %v1026
    %1376 = vmatpush1.bf16.msra.mxu0 %v1025
    %1377 = vmatprep.subr.bf16.mxu0 %v1030
    %1378 = vmatpush1.bf16.msra.mxu0 %v1029
    %1379 = vmatprep.subr.bf16.mxu0 %v1034
    %1380 = vmatpush1.bf16.msra.mxu0 %v1033
    %1381 = vmatprep.subr.bf16.mxu0 %v1038
    %1382 = vmatpush1.bf16.msra.mxu0 %v1037
    %1383 = vmatprep.subr.bf16.mxu0 %v1042
    %1384 = vmatpush1.bf16.msra.mxu0 %v1041
    %1385 = vmatprep.subr.bf16.mxu0 %v1046
    %1386 = vmatpush1.bf16.msra.mxu0 %v1045
    %1387 = vmatprep.subr.bf16.mxu0 %v1050
    %1388 = vmatpush1.bf16.msra.mxu0 %v1049
    %1389 = vmatprep.subr.bf16.mxu0 %v1054
    %1390 = vmatpush1.bf16.msra.mxu0 %v1053
    %1391 = vmatprep.subr.bf16.mxu0 %v1058
    %1392 = vmatpush1.bf16.msra.mxu0 %v1057
    %1393 = vmatprep.subr.bf16.mxu0 %v1062
    %1394 = vmatpush1.bf16.msra.mxu0 %v1061
    %1395 = vmatprep.subr.bf16.mxu0 %v1066
    %1396 = vmatpush1.bf16.msra.mxu0 %v1065
    %1397 = vmatprep.subr.bf16.mxu0 %v1070
    %1398 = vmatpush1.bf16.msra.mxu0 %v1069
    %1399 = vmatprep.subr.bf16.mxu0 %v1074
    %1400 = vmatpush1.bf16.msra.mxu0 %v1073
    %1401 = vmatprep.subr.bf16.mxu0 %v1078
    %1402 = vmatpush1.bf16.msra.mxu0 %v1077
    %1403 = vmatprep.mubr.bf16.mxu0 %v81
    %1404 = vmatmul.mubr.bf16.gmra.mrb[0].mxu0 %v80
    %v1405 = vpop.f32.mrb[0].mxu0
    %v1406 = vadd.f32 %v1363, %v1405
    %v1407 = vpop.f32.mrb[0].mxu0
    %v1408 = vadd.f32 %v1365, %v1407
    %v1409 = vpop.f32.mrb[0].mxu0
    %v1410 = vadd.f32 %v1367, %v1409
    %v1411 = vpop.f32.mrb[0].mxu0
    %v1412 = vadd.f32 %v1369, %v1411
    %1413 = vdwg.mxu0
    %1414 = vmatprep.subr.bf16.mxu0 %v1082
    %1415 = vmatpush1.bf16.msra.mxu0 %v1081
    %1416 = vmatprep.subr.bf16.mxu0 0
    %1417 = vmatpush1.bf16.msra.mxu0 0
    %1418 = vmatprep.subr.bf16.mxu0 0
    %1419 = vmatpush1.bf16.msra.mxu0 0
    %1420 = vmatprep.subr.bf16.mxu0 0
    %1421 = vmatpush1.bf16.msra.mxu0 0
    %1422 = vmatprep.subr.bf16.mxu0 0
    %1423 = vmatpush1.bf16.msra.mxu0 0
    %1424 = vmatprep.subr.bf16.mxu0 0
    %1425 = vmatpush1.bf16.msra.mxu0 0
    %1426 = vmatprep.subr.bf16.mxu0 0
    %1427 = vmatpush1.bf16.msra.mxu0 0
    %1428 = vmatprep.subr.bf16.mxu0 0
    %1429 = vmatpush1.bf16.msra.mxu0 0
    %1430 = vmatprep.subr.bf16.mxu0 0
    %1431 = vmatpush1.bf16.msra.mxu0 0
    %1432 = vmatprep.subr.bf16.mxu0 0
    %1433 = vmatpush1.bf16.msra.mxu0 0
    %1434 = vmatprep.subr.bf16.mxu0 0
    %1435 = vmatpush1.bf16.msra.mxu0 0
    %1436 = vmatprep.subr.bf16.mxu0 0
    %1437 = vmatpush1.bf16.msra.mxu0 0
    %1438 = vmatprep.subr.bf16.mxu0 0
    %1439 = vmatpush1.bf16.msra.mxu0 0
    %1440 = vmatprep.subr.bf16.mxu0 0
    %1441 = vmatpush1.bf16.msra.mxu0 0
    %1442 = vmatprep.subr.bf16.mxu0 0
    %1443 = vmatpush1.bf16.msra.mxu0 0
    %1444 = vmatprep.subr.bf16.mxu0 0
    %1445 = vmatpush1.bf16.msra.mxu0 0
    %1446 = vmatprep.mubr.bf16.mxu0 0
    %1447 = vmatmul.mubr.bf16.gmra.mrb[0].mxu0 %v1283
    %v1448 = vpop.f32.mrb[0].mxu0
    %v1449 = vadd.f32 %v1406, %v1448
    %v1450 = vpop.f32.mrb[0].mxu0
    %v1451 = vadd.f32 %v1408, %v1450
    %v1452 = vpop.f32.mrb[0].mxu0
    %v1453 = vadd.f32 %v1410, %v1452
    %v1454 = vpop.f32.mrb[0].mxu0
    %v1455 = vadd.f32 %v1412, %v1454
    %1456 = vdwg.mxu0
    %1457 = vmatprep.subr.bf16.mxu0 %v892
    %1458 = vmatpush1.bf16.msra.mxu0 %v891
    %1459 = vmatprep.subr.bf16.mxu0 %v896
    %1460 = vmatpush1.bf16.msra.mxu0 %v895
    %1461 = vmatprep.subr.bf16.mxu0 %v900
    %1462 = vmatpush1.bf16.msra.mxu0 %v899
    %1463 = vmatprep.subr.bf16.mxu0 %v904
    %1464 = vmatpush1.bf16.msra.mxu0 %v903
    %1465 = vmatprep.subr.bf16.mxu0 %v908
    %1466 = vmatpush1.bf16.msra.mxu0 %v907
    %1467 = vmatprep.subr.bf16.mxu0 %v912
    %1468 = vmatpush1.bf16.msra.mxu0 %v911
    %1469 = vmatprep.subr.bf16.mxu0 %v916
    %1470 = vmatpush1.bf16.msra.mxu0 %v915
    %1471 = vmatprep.subr.bf16.mxu0 %v920
    %1472 = vmatpush1.bf16.msra.mxu0 %v919
    %1473 = vmatprep.subr.bf16.mxu0 %v924
    %1474 = vmatpush1.bf16.msra.mxu0 %v923
    %1475 = vmatprep.subr.bf16.mxu0 %v928
    %1476 = vmatpush1.bf16.msra.mxu0 %v927
    %1477 = vmatprep.subr.bf16.mxu0 %v932
    %1478 = vmatpush1.bf16.msra.mxu0 %v931
    %1479 = vmatprep.subr.bf16.mxu0 %v936
    %1480 = vmatpush1.bf16.msra.mxu0 %v935
    %1481 = vmatprep.subr.bf16.mxu0 %v940
    %1482 = vmatpush1.bf16.msra.mxu0 %v939
    %1483 = vmatprep.subr.bf16.mxu0 %v944
    %1484 = vmatpush1.bf16.msra.mxu0 %v943
    %1485 = vmatprep.subr.bf16.mxu0 %v948
    %1486 = vmatpush1.bf16.msra.mxu0 %v947
    %1487 = vmatprep.subr.bf16.mxu0 %v952
    %1488 = vmatpush1.bf16.msra.mxu0 %v951
    %1489 = vmatprep.mubr.bf16.mxu0 %v77
    %1490 = vmatmul.mubr.bf16.gmra.mrb[0].mxu0 %v76
    %v1491 = vpop.f32.mrb[0].mxu0
    %v1492 = vadd.f32 %v292, %v1491
    %v1493 = vpop.f32.mrb[0].mxu0
    %v1494 = vadd.f32 %v296, %v1493
    %v1495 = vpop.f32.mrb[0].mxu0
    %v1496 = vadd.f32 %v292, %v1495
    %v1497 = vpop.f32.mrb[0].mxu0
    %v1498 = vadd.f32 %v296, %v1497
    %1499 = vdwg.mxu0
    %1500 = vmatprep.subr.bf16.mxu0 %v956
    %1501 = vmatpush1.bf16.msra.mxu0 %v955
    %1502 = vmatprep.subr.bf16.mxu0 %v960
    %1503 = vmatpush1.bf16.msra.mxu0 %v959
    %1504 = vmatprep.subr.bf16.mxu0 %v964
    %1505 = vmatpush1.bf16.msra.mxu0 %v963
    %1506 = vmatprep.subr.bf16.mxu0 %v968
    %1507 = vmatpush1.bf16.msra.mxu0 %v967
    %1508 = vmatprep.subr.bf16.mxu0 %v972
    %1509 = vmatpush1.bf16.msra.mxu0 %v971
    %1510 = vmatprep.subr.bf16.mxu0 %v976
    %1511 = vmatpush1.bf16.msra.mxu0 %v975
    %1512 = vmatprep.subr.bf16.mxu0 %v980
    %1513 = vmatpush1.bf16.msra.mxu0 %v979
    %1514 = vmatprep.subr.bf16.mxu0 %v984
    %1515 = vmatpush1.bf16.msra.mxu0 %v983
    %1516 = vmatprep.subr.bf16.mxu0 %v988
    %1517 = vmatpush1.bf16.msra.mxu0 %v987
    %1518 = vmatprep.subr.bf16.mxu0 %v992
    %1519 = vmatpush1.bf16.msra.mxu0 %v991
    %1520 = vmatprep.subr.bf16.mxu0 %v996
    %1521 = vmatpush1.bf16.msra.mxu0 %v995
    %1522 = vmatprep.subr.bf16.mxu0 %v1000
    %1523 = vmatpush1.bf16.msra.mxu0 %v999
    %1524 = vmatprep.subr.bf16.mxu0 %v1004
    %1525 = vmatpush1.bf16.msra.mxu0 %v1003
    %1526 = vmatprep.subr.bf16.mxu0 %v1008
    %1527 = vmatpush1.bf16.msra.mxu0 %v1007
    %1528 = vmatprep.subr.bf16.mxu0 %v1012
    %1529 = vmatpush1.bf16.msra.mxu0 %v1011
    %1530 = vmatprep.subr.bf16.mxu0 %v1016
    %1531 = vmatpush1.bf16.msra.mxu0 %v1015
    %1532 = vmatprep.mubr.bf16.mxu0 %v79
    %1533 = vmatmul.mubr.bf16.gmra.mrb[0].mxu0 %v78
    %v1534 = vpop.f32.mrb[0].mxu0
    %v1535 = vadd.f32 %v1492, %v1534
    %v1536 = vpop.f32.mrb[0].mxu0
    %v1537 = vadd.f32 %v1494, %v1536
    %v1538 = vpop.f32.mrb[0].mxu0
    %v1539 = vadd.f32 %v1496, %v1538
    %v1540 = vpop.f32.mrb[0].mxu0
    %v1541 = vadd.f32 %v1498, %v1540
    %1542 = vdwg.mxu0
    %1543 = vmatprep.subr.bf16.mxu0 %v1020
    %1544 = vmatpush1.bf16.msra.mxu0 %v1019
    %1545 = vmatprep.subr.bf16.mxu0 %v1024
    %1546 = vmatpush1.bf16.msra.mxu0 %v1023
    %1547 = vmatprep.subr.bf16.mxu0 %v1028
    %1548 = vmatpush1.bf16.msra.mxu0 %v1027
    %1549 = vmatprep.subr.bf16.mxu0 %v1032
    %1550 = vmatpush1.bf16.msra.mxu0 %v1031
    %1551 = vmatprep.subr.bf16.mxu0 %v1036
    %1552 = vmatpush1.bf16.msra.mxu0 %v1035
    %1553 = vmatprep.subr.bf16.mxu0 %v1040
    %1554 = vmatpush1.bf16.msra.mxu0 %v1039
    %1555 = vmatprep.subr.bf16.mxu0 %v1044
    %1556 = vmatpush1.bf16.msra.mxu0 %v1043
    %1557 = vmatprep.subr.bf16.mxu0 %v1048
    %1558 = vmatpush1.bf16.msra.mxu0 %v1047
    %1559 = vmatprep.subr.bf16.mxu0 %v1052
    %1560 = vmatpush1.bf16.msra.mxu0 %v1051
    %1561 = vmatprep.subr.bf16.mxu0 %v1056
    %1562 = vmatpush1.bf16.msra.mxu0 %v1055
    %1563 = vmatprep.subr.bf16.mxu0 %v1060
    %1564 = vmatpush1.bf16.msra.mxu0 %v1059
    %1565 = vmatprep.subr.bf16.mxu0 %v1064
    %1566 = vmatpush1.bf16.msra.mxu0 %v1063
    %1567 = vmatprep.subr.bf16.mxu0 %v1068
    %1568 = vmatpush1.bf16.msra.mxu0 %v1067
    %1569 = vmatprep.subr.bf16.mxu0 %v1072
    %1570 = vmatpush1.bf16.msra.mxu0 %v1071
    %1571 = vmatprep.subr.bf16.mxu0 %v1076
    %1572 = vmatpush1.bf16.msra.mxu0 %v1075
    %1573 = vmatprep.subr.bf16.mxu0 %v1080
    %1574 = vmatpush1.bf16.msra.mxu0 %v1079
    %1575 = vmatprep.mubr.bf16.mxu0 %v81
    %1576 = vmatmul.mubr.bf16.gmra.mrb[0].mxu0 %v80
    %v1577 = vpop.f32.mrb[0].mxu0
    %v1578 = vadd.f32 %v1535, %v1577
    %v1579 = vpop.f32.mrb[0].mxu0
    %v1580 = vadd.f32 %v1537, %v1579
    %v1581 = vpop.f32.mrb[0].mxu0
    %v1582 = vadd.f32 %v1539, %v1581
    %v1583 = vpop.f32.mrb[0].mxu0
    %v1584 = vadd.f32 %v1541, %v1583
    %1585 = vdwg.mxu0
    %1586 = vmatprep.subr.bf16.mxu0 %v1084
    %1587 = vmatpush1.bf16.msra.mxu0 %v1083
    %1588 = vmatprep.subr.bf16.mxu0 0
    %1589 = vmatpush1.bf16.msra.mxu0 0
    %1590 = vmatprep.subr.bf16.mxu0 0
    %1591 = vmatpush1.bf16.msra.mxu0 0
    %1592 = vmatprep.subr.bf16.mxu0 0
    %1593 = vmatpush1.bf16.msra.mxu0 0
    %1594 = vmatprep.subr.bf16.mxu0 0
    %1595 = vmatpush1.bf16.msra.mxu0 0
    %1596 = vmatprep.subr.bf16.mxu0 0
    %1597 = vmatpush1.bf16.msra.mxu0 0
    %1598 = vmatprep.subr.bf16.mxu0 0
    %1599 = vmatpush1.bf16.msra.mxu0 0
    %1600 = vmatprep.subr.bf16.mxu0 0
    %1601 = vmatpush1.bf16.msra.mxu0 0
    %1602 = vmatprep.subr.bf16.mxu0 0
    %1603 = vmatpush1.bf16.msra.mxu0 0
    %1604 = vmatprep.subr.bf16.mxu0 0
    %1605 = vmatpush1.bf16.msra.mxu0 0
    %1606 = vmatprep.subr.bf16.mxu0 0
    %1607 = vmatpush1.bf16.msra.mxu0 0
    %1608 = vmatprep.subr.bf16.mxu0 0
    %1609 = vmatpush1.bf16.msra.mxu0 0
    %1610 = vmatprep.subr.bf16.mxu0 0
    %1611 = vmatpush1.bf16.msra.mxu0 0
    %1612 = vmatprep.subr.bf16.mxu0 0
    %1613 = vmatpush1.bf16.msra.mxu0 0
    %1614 = vmatprep.subr.bf16.mxu0 0
    %1615 = vmatpush1.bf16.msra.mxu0 0
    %1616 = vmatprep.subr.bf16.mxu0 0
    %1617 = vmatpush1.bf16.msra.mxu0 0
    %1618 = vmatprep.mubr.bf16.mxu0 0
    %1619 = vmatmul.mubr.bf16.gmra.mrb[0].mxu0 %v1283
    %v1620 = vpop.f32.mrb[0].mxu0
    %v1621 = vadd.f32 %v1578, %v1620
    %v1622 = vpop.f32.mrb[0].mxu0
    %v1623 = vadd.f32 %v1580, %v1622
    %v1624 = vpop.f32.mrb[0].mxu0
    %v1625 = vadd.f32 %v1582, %v1624
    %v1626 = vpop.f32.mrb[0].mxu0
    %v1627 = vadd.f32 %v1584, %v1626
    %1628 = vdwg.mxu0
    %v1629 = vmax.f32 %v1449, 0.0
    %v1630 = vmax.f32 %v1451, 0.0
    %v1631 = vmax.f32 %v1621, 0.0
    %v1632 = vmax.f32 %v1623, 0.0
    %v1633 = vmax.f32 %v1453, 0.0
    %v1634 = vmax.f32 %v1455, 0.0
    %v1635 = vmax.f32 %v1625, 0.0
    %v1636 = vmax.f32 %v1627, 0.0
    %v1637 = vpack.c.bf16 %v1633, %v1629
    %v1638 = vpack.c.bf16 %v1634, %v1630
    %v1639 = vpack.c.bf16 %v1635, %v1631
    %v1640 = vpack.c.bf16 %v1636, %v1632
    %v1641 = vld [vmem:[#allocation6] sm:$0xf]
    %v1642 = vld [vmem:[#allocation6 + $0x4] sm:$0xf]
    %v1643 = vld [vmem:[#allocation6 + $0x8] sm:$0xf]
    %v1644 = vld [vmem:[#allocation6 + $0xc] sm:$0xf]
    %v1645 = vld [vmem:[#allocation6 + $0x10] sm:$0xf]
    %v1646 = vld [vmem:[#allocation6 + $0x14] sm:$0xf]
    %v1647 = vld [vmem:[#allocation6 + $0x18] sm:$0xf]
    %v1648 = vld [vmem:[#allocation6 + $0x1c] sm:$0xf]
    %v1649 = vld [vmem:[#allocation6 + $0x20] sm:$0xf]
    %v1650 = vld [vmem:[#allocation6 + $0x24] sm:$0xf]
    %v1651 = vld [vmem:[#allocation6 + $0x28] sm:$0xf]
    %v1652 = vld [vmem:[#allocation6 + $0x2c] sm:$0xf]
    %v1653 = vld [vmem:[#allocation6 + $0x30] sm:$0xf]
    %v1654 = vld [vmem:[#allocation6 + $0x34] sm:$0xf]
    %v1655 = vld [vmem:[#allocation6 + $0x38] sm:$0xf]
    %v1656 = vld [vmem:[#allocation6 + $0x3c] sm:$0xf]
    %v1657 = vld [vmem:[#allocation6 + $0x40] sm:$0xf]
    %v1658 = vld [vmem:[#allocation6 + $0x44] sm:$0xf]
    %v1659 = vld [vmem:[#allocation6 + $0x48] sm:$0xf]
    %v1660 = vld [vmem:[#allocation6 + $0x4c] sm:$0xf]
    %v1661 = vld [vmem:[#allocation6 + $0x50] sm:$0xf]
    %v1662 = vld [vmem:[#allocation6 + $0x54] sm:$0xf]
    %v1663 = vld [vmem:[#allocation6 + $0x58] sm:$0xf]
    %v1664 = vld [vmem:[#allocation6 + $0x5c] sm:$0xf]
    %v1665 = vld [vmem:[#allocation6 + $0x60] sm:$0xf]
    %v1666 = vld [vmem:[#allocation6 + $0x64] sm:$0xf]
    %v1667 = vld [vmem:[#allocation6 + $0x68] sm:$0xf]
    %v1668 = vld [vmem:[#allocation6 + $0x6c] sm:$0xf]
    %v1669 = vld [vmem:[#allocation6 + $0x70] sm:$0xf]
    %v1670 = vld [vmem:[#allocation6 + $0x74] sm:$0xf]
    %v1671 = vld [vmem:[#allocation6 + $0x78] sm:$0xf]
    %v1672 = vld [vmem:[#allocation6 + $0x7c] sm:$0xf]
    %v1673 = vld [vmem:[#allocation6 + $0x80] sm:$0xf]
    %v1674 = vld [vmem:[#allocation6 + $0x84] sm:$0xf]
    %v1675 = vld [vmem:[#allocation6 + $0x88] sm:$0xf]
    %v1676 = vld [vmem:[#allocation6 + $0x8c] sm:$0xf]
    %v1677 = vld [vmem:[#allocation6 + $0x90] sm:$0xf]
    %v1678 = vld [vmem:[#allocation6 + $0x94] sm:$0xf]
    %v1679 = vld [vmem:[#allocation6 + $0x98] sm:$0xf]
    %v1680 = vld [vmem:[#allocation6 + $0x9c] sm:$0xf]
    %v1681 = vld [vmem:[#allocation6 + $0xa0] sm:$0xf]
    %v1682 = vld [vmem:[#allocation6 + $0xa4] sm:$0xf]
    %v1683 = vld [vmem:[#allocation6 + $0xa8] sm:$0xf]
    %v1684 = vld [vmem:[#allocation6 + $0xac] sm:$0xf]
    %v1685 = vld [vmem:[#allocation6 + $0xb0] sm:$0xf]
    %v1686 = vld [vmem:[#allocation6 + $0xb4] sm:$0xf]
    %v1687 = vld [vmem:[#allocation6 + $0xb8] sm:$0xf]
    %v1688 = vld [vmem:[#allocation6 + $0xbc] sm:$0xf]
    %v1689 = vld [vmem:[#allocation6 + $0xc0] sm:$0xf]
    %v1690 = vld [vmem:[#allocation6 + $0xc4] sm:$0xf]
    %v1691 = vld [vmem:[#allocation6 + $0xc8] sm:$0xf]
    %v1692 = vld [vmem:[#allocation6 + $0xcc] sm:$0xf]
    %v1693 = vld [vmem:[#allocation6 + $0xd0] sm:$0xf]
    %v1694 = vld [vmem:[#allocation6 + $0xd4] sm:$0xf]
    %v1695 = vld [vmem:[#allocation6 + $0xd8] sm:$0xf]
    %v1696 = vld [vmem:[#allocation6 + $0xdc] sm:$0xf]
    %v1697 = vld [vmem:[#allocation6 + $0xe0] sm:$0xf]
    %v1698 = vld [vmem:[#allocation6 + $0xe4] sm:$0xf]
    %v1699 = vld [vmem:[#allocation6 + $0xe8] sm:$0xf]
    %v1700 = vld [vmem:[#allocation6 + $0xec] sm:$0xf]
    %v1701 = vld [vmem:[#allocation6 + $0xf0] sm:$0xf]
    %v1702 = vld [vmem:[#allocation6 + $0xf4] sm:$0xf]
    %v1703 = vld [vmem:[#allocation6 + $0xf8] sm:$0xf]
    %v1704 = vld [vmem:[#allocation6 + $0xfc] sm:$0xf]
    %v1705 = vld [vmem:[%s4] sm:$0x1]
    %v1707 = vlaneseq
    %v1708 = vshrl.u32 %v1707, 7
    %v1709 = vsub.s32 0, %v1708
    %v1710 = vrot.slane %v1705, %v1709
    %v1776 = vunpack.c.l.b16 %v1641
    %v1777 = vunpack.c.l.b16 %v1642
    %v1778 = vunpack.c.l.b16 %v1643
    %v1779 = vunpack.c.l.b16 %v1644
    %v1780 = vunpack.c.l.b16 %v1645
    %v1781 = vunpack.c.l.b16 %v1646
    %v1782 = vunpack.c.l.b16 %v1647
    %v1783 = vunpack.c.l.b16 %v1648
    %v1784 = vunpack.c.l.b16 %v1649
    %v1785 = vunpack.c.l.b16 %v1650
    %v1786 = vunpack.c.l.b16 %v1651
    %v1787 = vunpack.c.l.b16 %v1652
    %v1788 = vunpack.c.l.b16 %v1653
    %v1789 = vunpack.c.l.b16 %v1654
    %v1790 = vunpack.c.l.b16 %v1655
    %v1791 = vunpack.c.l.b16 %v1656
    %v1792 = vunpack.c.l.b16 %v1657
    %v1793 = vunpack.c.l.b16 %v1658
    %v1794 = vunpack.c.l.b16 %v1659
    %v1795 = vunpack.c.l.b16 %v1660
    %v1796 = vunpack.c.l.b16 %v1661
    %v1797 = vunpack.c.l.b16 %v1662
    %v1798 = vunpack.c.l.b16 %v1663
    %v1799 = vunpack.c.l.b16 %v1664
    %v1800 = vunpack.c.l.b16 %v1665
    %v1801 = vunpack.c.l.b16 %v1666
    %v1802 = vunpack.c.l.b16 %v1667
    %v1803 = vunpack.c.l.b16 %v1668
    %v1804 = vunpack.c.l.b16 %v1669
    %v1805 = vunpack.c.l.b16 %v1670
    %v1806 = vunpack.c.l.b16 %v1671
    %v1807 = vunpack.c.l.b16 %v1672
    %v1808 = vunpack.c.l.b16 %v1673
    %v1809 = vunpack.c.l.b16 %v1674
    %v1810 = vunpack.c.l.b16 %v1675
    %v1811 = vunpack.c.l.b16 %v1676
    %v1812 = vunpack.c.l.b16 %v1677
    %v1813 = vunpack.c.l.b16 %v1678
    %v1814 = vunpack.c.l.b16 %v1679
    %v1815 = vunpack.c.l.b16 %v1680
    %v1816 = vunpack.c.l.b16 %v1681
    %v1817 = vunpack.c.l.b16 %v1682
    %v1818 = vunpack.c.l.b16 %v1683
    %v1819 = vunpack.c.l.b16 %v1684
    %v1820 = vunpack.c.l.b16 %v1685
    %v1821 = vunpack.c.l.b16 %v1686
    %v1822 = vunpack.c.l.b16 %v1687
    %v1823 = vunpack.c.l.b16 %v1688
    %v1824 = vunpack.c.l.b16 %v1689
    %v1825 = vunpack.c.l.b16 %v1690
    %v1826 = vunpack.c.l.b16 %v1691
    %v1827 = vunpack.c.l.b16 %v1692
    %v1828 = vunpack.c.l.b16 %v1693
    %v1829 = vunpack.c.l.b16 %v1694
    %v1830 = vunpack.c.l.b16 %v1695
    %v1831 = vunpack.c.l.b16 %v1696
    %v1832 = vunpack.c.l.b16 %v1697
    %v1833 = vunpack.c.l.b16 %v1698
    %v1834 = vunpack.c.l.b16 %v1699
    %v1835 = vunpack.c.l.b16 %v1700
    %v1836 = vunpack.c.l.b16 %v1701
    %v1837 = vunpack.c.l.b16 %v1702
    %v1838 = vunpack.c.l.b16 %v1703
    %v1839 = vunpack.c.l.b16 %v1704
    %v1840 = vpack.c.b16 %v1777, %v1776
    %v1841 = vpack.c.b16 %v1779, %v1778
    %v1842 = vpack.c.b16 %v1781, %v1780
    %v1843 = vpack.c.b16 %v1783, %v1782
    %v1844 = vpack.c.b16 %v1785, %v1784
    %v1845 = vpack.c.b16 %v1787, %v1786
    %v1846 = vpack.c.b16 %v1789, %v1788
    %v1847 = vpack.c.b16 %v1791, %v1790
    %v1848 = vpack.c.b16 %v1793, %v1792
    %v1849 = vpack.c.b16 %v1795, %v1794
    %v1850 = vpack.c.b16 %v1797, %v1796
    %v1851 = vpack.c.b16 %v1799, %v1798
    %v1852 = vpack.c.b16 %v1801, %v1800
    %v1853 = vpack.c.b16 %v1803, %v1802
    %v1854 = vpack.c.b16 %v1805, %v1804
    %v1855 = vpack.c.b16 %v1807, %v1806
    %v1856 = vpack.c.b16 %v1809, %v1808
    %v1857 = vpack.c.b16 %v1811, %v1810
    %v1858 = vpack.c.b16 %v1813, %v1812
    %v1859 = vpack.c.b16 %v1815, %v1814
    %v1860 = vpack.c.b16 %v1817, %v1816
    %v1861 = vpack.c.b16 %v1819, %v1818
    %v1862 = vpack.c.b16 %v1821, %v1820
    %v1863 = vpack.c.b16 %v1823, %v1822
    %v1864 = vpack.c.b16 %v1825, %v1824
    %v1865 = vpack.c.b16 %v1827, %v1826
    %v1866 = vpack.c.b16 %v1829, %v1828
    %v1867 = vpack.c.b16 %v1831, %v1830
    %v1868 = vpack.c.b16 %v1833, %v1832
    %v1869 = vpack.c.b16 %v1835, %v1834
    %v1870 = vpack.c.b16 %v1837, %v1836
    %v1871 = vpack.c.b16 %v1839, %v1838
    %1904 = vmatprep.subr.bf16.mxu0 0
    %1905 = vmatpush1.bf16.msra.mxu0 %v1840
    %1906 = vmatprep.subr.bf16.mxu0 0
    %1907 = vmatpush1.bf16.msra.mxu0 %v1841
    %1908 = vmatprep.subr.bf16.mxu0 0
    %1909 = vmatpush1.bf16.msra.mxu0 %v1842
    %1910 = vmatprep.subr.bf16.mxu0 0
    %1911 = vmatpush1.bf16.msra.mxu0 %v1843
    %1912 = vmatprep.subr.bf16.mxu0 0
    %1913 = vmatpush1.bf16.msra.mxu0 %v1844
    %1914 = vmatprep.subr.bf16.mxu0 0
    %1915 = vmatpush1.bf16.msra.mxu0 %v1845
    %1916 = vmatprep.subr.bf16.mxu0 0
    %1917 = vmatpush1.bf16.msra.mxu0 %v1846
    %1918 = vmatprep.subr.bf16.mxu0 0
    %1919 = vmatpush1.bf16.msra.mxu0 %v1847
    %1920 = vmatprep.subr.bf16.mxu0 0
    %1921 = vmatpush1.bf16.msra.mxu0 %v1848
    %1922 = vmatprep.subr.bf16.mxu0 0
    %1923 = vmatpush1.bf16.msra.mxu0 %v1849
    %1924 = vmatprep.subr.bf16.mxu0 0
    %1925 = vmatpush1.bf16.msra.mxu0 %v1850
    %1926 = vmatprep.subr.bf16.mxu0 0
    %1927 = vmatpush1.bf16.msra.mxu0 %v1851
    %1928 = vmatprep.subr.bf16.mxu0 0
    %1929 = vmatpush1.bf16.msra.mxu0 %v1852
    %1930 = vmatprep.subr.bf16.mxu0 0
    %1931 = vmatpush1.bf16.msra.mxu0 %v1853
    %1932 = vmatprep.subr.bf16.mxu0 0
    %1933 = vmatpush1.bf16.msra.mxu0 %v1854
    %1934 = vmatprep.subr.bf16.mxu0 0
    %1935 = vmatpush1.bf16.msra.mxu0 %v1855
    %1936 = vmatprep.mubr.bf16.mxu0 %v1638
    %1937 = vmatmul.mubr.bf16.gmra.mrb[0].mxu0 %v1637
    %v1938 = vpop.f32.mrb[0].mxu0
    %v1939 = vadd.f32 %v1710, %v1938
    %v1940 = vpop.f32.mrb[0].mxu0
    %v1941 = vpop.f32.mrb[0].mxu0
    %v1942 = vadd.f32 %v1710, %v1941
    %v1943 = vpop.f32.mrb[0].mxu0
    %1944 = vdwg.mxu0
    %1945 = vmatprep.subr.bf16.mxu0 0
    %1946 = vmatpush1.bf16.msra.mxu0 %v1856
    %1947 = vmatprep.subr.bf16.mxu0 0
    %1948 = vmatpush1.bf16.msra.mxu0 %v1857
    %1949 = vmatprep.subr.bf16.mxu0 0
    %1950 = vmatpush1.bf16.msra.mxu0 %v1858
    %1951 = vmatprep.subr.bf16.mxu0 0
    %1952 = vmatpush1.bf16.msra.mxu0 %v1859
    %1953 = vmatprep.subr.bf16.mxu0 0
    %1954 = vmatpush1.bf16.msra.mxu0 %v1860
    %1955 = vmatprep.subr.bf16.mxu0 0
    %1956 = vmatpush1.bf16.msra.mxu0 %v1861
    %1957 = vmatprep.subr.bf16.mxu0 0
    %1958 = vmatpush1.bf16.msra.mxu0 %v1862
    %1959 = vmatprep.subr.bf16.mxu0 0
    %1960 = vmatpush1.bf16.msra.mxu0 %v1863
    %1961 = vmatprep.subr.bf16.mxu0 0
    %1962 = vmatpush1.bf16.msra.mxu0 %v1864
    %1963 = vmatprep.subr.bf16.mxu0 0
    %1964 = vmatpush1.bf16.msra.mxu0 %v1865
    %1965 = vmatprep.subr.bf16.mxu0 0
    %1966 = vmatpush1.bf16.msra.mxu0 %v1866
    %1967 = vmatprep.subr.bf16.mxu0 0
    %1968 = vmatpush1.bf16.msra.mxu0 %v1867
    %1969 = vmatprep.subr.bf16.mxu0 0
    %1970 = vmatpush1.bf16.msra.mxu0 %v1868
    %1971 = vmatprep.subr.bf16.mxu0 0
    %1972 = vmatpush1.bf16.msra.mxu0 %v1869
    %1973 = vmatprep.subr.bf16.mxu0 0
    %1974 = vmatpush1.bf16.msra.mxu0 %v1870
    %1975 = vmatprep.subr.bf16.mxu0 0
    %1976 = vmatpush1.bf16.msra.mxu0 %v1871
    %1977 = vmatprep.mubr.bf16.mxu0 %v1640
    %1978 = vmatmul.mubr.bf16.gmra.mrb[0].mxu0 %v1639
    %v1979 = vpop.f32.mrb[0].mxu0
    %v1980 = vadd.f32 %v1939, %v1979
    %v1981 = vpop.f32.mrb[0].mxu0
    %v1982 = vpop.f32.mrb[0].mxu0
    %v1983 = vadd.f32 %v1942, %v1982
    %v1984 = vpop.f32.mrb[0].mxu0
    %1985 = vdwg.mxu0
    %v1986 = vpack.c.bf16 %v1983, %v1980
    %v1988 = vunpack.c.l.b16 %v1986
    %v1989 = vunpack.c.h.b16 %v1986
    %v1990 = vpack.c.b16 %v1988, %v1988
    %v1991 = vpack.c.b16 %v1989, %v1989
    %1994 = vst [vmem:[%s5] sm:$0xf] %v1990
    %1995 = vst [vmem:[%s5 + $0x4] sm:$0xf] %v1991
    // Predicated region
    $region34: #{mlp_forward.1} parent=1 // pred_check
      _
    $region35: #{mlp_forward.1} parent=1 // pred_check_branch
      %1997 = sbr.rel (0) target = $region37
    $region36: #{mlp_forward.1} parent=1 // pred_region
      _
    $region37: #{mlp_forward.1} parent=1 // pred_fallthru
      _
    // Predicated region
    $region38: #{mlp_forward.1} parent=1 // pred_check
      _
    $region39: #{mlp_forward.1} parent=1 // pred_check_branch
      %1999 = sbr.rel (0) target = $region41
    $region40: #{mlp_forward.1} parent=1 // pred_region
      _
    $region41: #{mlp_forward.1} parent=1 // pred_fallthru
      _
    %2000 = vsyncpa [#allocation3], 1
    %2001 = vsyncpa [#allocation5], 1

</llo_original>
